<compile_context>
chip_gen: v6e
topology: v6e:2x2x1
jax: 0.10.0
libtpu: 0.0.40
codegen_flags: <defaults>
</compile_context>

<pallas_src>
import functools
import math

import jax
import jax.numpy as jnp
from jax import lax
from jax.experimental import pallas as pl
from jax.experimental.pallas import tpu as pltpu

_LANES = 128
_SUBLANES = 8


def _round_up(x, m):
    return ((x + m - 1) // m) * m


def _logsumexp(x, axis):
    m = jnp.max(x, axis=axis, keepdims=True)
    return jnp.squeeze(m, axis=axis) + jnp.log(jnp.sum(jnp.exp(x - m), axis=axis))


def _ssn_loss_kernel(mean_ref, samp_ref, tgt_ref,
                     xent_ref, inter_ref, psum_ref, tsum_ref, mc_ref,
                     *, num_classes, num_samples, tile_rows):
    """Fused per-(batch, voxel-tile) pass.

    Accumulates into vreg-shaped (8, 128) f32 output-resident accumulators:
      xent_ref  (8,128)   : sum of per-voxel cross entropy of the mean logits
      inter_ref (C,8,128) : sum of softmax(mean) * onehot   (Dice numerators)
      psum_ref  (C,8,128) : sum of softmax(mean)            (Dice denominators)
      tsum_ref  (C,8,128) : sum of onehot(target)           (Dice denominators)
      mc_ref    (S,8,128) : sum over voxels of per-sample log p(target)
    """
    v_step = pl.program_id(1)

    @pl.when(v_step == 0)
    def _init():
        xent_ref[...] = jnp.zeros_like(xent_ref)
        inter_ref[...] = jnp.zeros_like(inter_ref)
        psum_ref[...] = jnp.zeros_like(psum_ref)
        tsum_ref[...] = jnp.zeros_like(tsum_ref)
        mc_ref[...] = jnp.zeros_like(mc_ref)

    groups = tile_rows // _SUBLANES

    def fold(a):
        # (..., tile_rows, 128) -> (..., 8, 128): vreg-group partial sums
        # (pure VPU adds, no cross-lane reduction inside the hot loop).
        return a.reshape(a.shape[:-2] + (groups, _SUBLANES, _LANES)).sum(axis=-3)

    tgt = tgt_ref[...]                                      # (tr,128) int32, -1 = pad
    validf = (tgt >= 0).astype(jnp.float32)                 # (tr,128)
    cls = lax.broadcasted_iota(jnp.int32, (num_classes, tile_rows, _LANES), 0)
    onehot = (tgt[None] == cls).astype(jnp.float32)         # (C,tr,128); zero on padding

    def log_softmax_parts(x):
        # x: (C, tr, 128) f32
        m = jnp.max(x, axis=0)                              # (tr,128)
        e = jnp.exp(x - m[None])                            # (C,tr,128)
        se = jnp.sum(e, axis=0)                             # (tr,128)
        lse = m + jnp.log(se)                               # (tr,128)
        xt = jnp.sum(x * onehot, axis=0)                    # (tr,128) logit at target
        return lse, xt, e, se

    # ---- combo branch (mean logits): cross entropy + soft-Dice statistics ----
    xm = mean_ref[...].astype(jnp.float32)                  # (C,tr,128)
    lse, xt, e, se = log_softmax_parts(xm)
    ce = (lse - xt) * validf                                # masked per-voxel CE
    probs = e * (validf / se)[None]                         # masked softmax
    xent_ref[...] += fold(ce)
    inter_ref[...] += fold(probs * onehot)
    psum_ref[...] += fold(probs)
    tsum_ref[...] += fold(onehot)

    # ---- MC-integral branch: one sample at a time keeps f32 temporaries small ----
    for i in range(num_samples):
        xs = samp_ref[i].astype(jnp.float32)                # (C,tr,128)
        lse_s, xt_s, _, _ = log_softmax_parts(xs)
        mc_ref[i] += fold((xt_s - lse_s) * validf)          # log p(target | sample i)


def ssn_combined_dice_xent_and_mc_loss(results, target, *, dice_factor=5.0,
                                       xent_factor=0.01, eps=1e-5,
                                       max_tile_rows=512,
                                       vmem_budget_bytes=8 * 1024 * 1024):
    """JAX/Pallas equivalent of SSNCombinedDiceXent_and_MC_loss_FromSamples.forward."""
    mean_logits = results[0]                  # (B, C, *spatial)
    samples = results[1]                      # (S, B, C, *spatial)
    S, B, C = samples.shape[0], samples.shape[1], samples.shape[2]
    assert C >= 2
    assert mean_logits.shape[:2] == (B, C)
    spatial = mean_logits.shape[2:]
    assert samples.shape[3:] == spatial
    assert target.shape == (B,) + spatial
    V = int(math.prod(spatial)) if spatial else 1           # n_voxels

    # ---- choose the voxel tile (rows of 128 lanes), sized against scoped VMEM ----
    in_bytes = jnp.dtype(samples.dtype).itemsize
    per_row = ((S * C + C) * _LANES * in_bytes * 2          # samples + mean, double-buffered
               + _LANES * 4 * 2                             # int32 target, double-buffered
               + 4 * C * _LANES * 4)                        # f32 temporaries (per-sample scale)
    rows_needed = pl.cdiv(V, _LANES)
    budget_rows = max(_SUBLANES, vmem_budget_bytes // per_row)
    tile_rows = min(max_tile_rows, budget_rows, _round_up(rows_needed, _SUBLANES))
    tile_rows = max(_SUBLANES, (tile_rows // _SUBLANES) * _SUBLANES)
    rows = _round_up(rows_needed, tile_rows)
    v_pad = rows * _LANES

    # ---- flatten spatial dims to lane-dense [rows, 128] slabs (padded + masked) ----
    def to_slab(a, lead):
        a = a.reshape(lead + (V,))                          # native dtype, no upcast
        if v_pad != V:
            a = jnp.pad(a, [(0, 0)] * len(lead) + [(0, v_pad - V)])
        return a.reshape(lead + (rows, _LANES))

    mean4 = to_slab(mean_logits, (B, C))                    # (B, C, rows, 128)
    samp5 = to_slab(samples, (S, B, C))                     # (S, B, C, rows, 128)
    tgt = target.reshape(B, V).astype(jnp.int32)
    if v_pad != V:
        tgt = jnp.pad(tgt, ((0, 0), (0, v_pad - V)), constant_values=-1)
    tgt3 = tgt.reshape(B, rows, _LANES)                     # (B, rows, 128)

    grid = (B, rows // tile_rows)
    kernel = functools.partial(_ssn_loss_kernel, num_classes=C, num_samples=S,
                               tile_rows=tile_rows)

    n_total = B * v_pad
    cost = pl.CostEstimate(
        flops=int(n_total * (S + 1) * (C * 4 + 6)),
        transcendentals=int(n_total * (S + 1) * (C + 1)),
        bytes_accessed=int(mean4.size * in_bytes + samp5.size * in_bytes
                           + tgt3.size * 4
                           + B * (1 + 3 * C + S) * _SUBLANES * _LANES * 4),
    )

    out_shapes = (
        jax.ShapeDtypeStruct((B, _SUBLANES, _LANES), jnp.float32),
        jax.ShapeDtypeStruct((B, C, _SUBLANES, _LANES), jnp.float32),
        jax.ShapeDtypeStruct((B, C, _SUBLANES, _LANES), jnp.float32),
        jax.ShapeDtypeStruct((B, C, _SUBLANES, _LANES), jnp.float32),
        jax.ShapeDtypeStruct((B, S, _SUBLANES, _LANES), jnp.float32),
    )
    out_specs = (
        pl.BlockSpec((None, _SUBLANES, _LANES), lambda b, v: (b, 0, 0)),
        pl.BlockSpec((None, C, _SUBLANES, _LANES), lambda b, v: (b, 0, 0, 0)),
        pl.BlockSpec((None, C, _SUBLANES, _LANES), lambda b, v: (b, 0, 0, 0)),
        pl.BlockSpec((None, C, _SUBLANES, _LANES), lambda b, v: (b, 0, 0, 0)),
        pl.BlockSpec((None, S, _SUBLANES, _LANES), lambda b, v: (b, 0, 0, 0)),
    )
    in_specs = [
        pl.BlockSpec((None, C, tile_rows, _LANES), lambda b, v: (b, 0, v, 0)),
        pl.BlockSpec((S, None, C, tile_rows, _LANES), lambda b, v: (0, b, 0, v, 0)),
        pl.BlockSpec((None, tile_rows, _LANES), lambda b, v: (b, v, 0)),
    ]

    xent_p, inter_p, psum_p, tsum_p, mc_p = pl.pallas_call(
        kernel,
        out_shape=out_shapes,
        grid=grid,
        in_specs=in_specs,
        out_specs=out_specs,
        compiler_params=pltpu.CompilerParams(
            dimension_semantics=("parallel", "arbitrary")),
        cost_estimate=cost,
    )(mean4, samp5, tgt3)

    # ---- tiny final reductions / scalar glue in plain JAX ----
    xent_mean = jnp.sum(xent_p) / (B * V)
    inter_bc = jnp.sum(inter_p, axis=(-2, -1))              # (B, C)
    psum_bc = jnp.sum(psum_p, axis=(-2, -1))
    tsum_bc = jnp.sum(tsum_p, axis=(-2, -1))
    dice = jnp.mean((2.0 * inter_bc + eps) / (psum_bc + tsum_bc + eps))
    combo = dice_factor * (1.0 - dice) + xent_factor * xent_mean

    mc_bs = jnp.sum(mc_p, axis=(-2, -1))                    # (B, S) per-sample log-lik sums
    loglik = jnp.mean(_logsumexp(mc_bs, axis=1) - jnp.log(float(S)))
    mc_loss = -loglik / float(V)

    mc_sample_ratio = (S - 1.0) / S
    return combo + mc_loss * xent_factor * mc_sample_ratio


def _reference_loss(results, target, *, dice_factor=5.0, xent_factor=0.01, eps=1e-5):
    """Plain-JAX reference (same math as the torch module + the chosen dice_xent)."""
    mean_logits = results[0].astype(jnp.float32)
    samples = results[1].astype(jnp.float32)
    S, B, C = samples.shape[0], samples.shape[1], samples.shape[2]
    V = int(math.prod(mean_logits.shape[2:]))
    x = mean_logits.reshape(B, C, V)
    t = target.reshape(B, V)
    onehot = jax.nn.one_hot(t, C, axis=1, dtype=jnp.float32)      # (B, C, V)

    logp = jax.nn.log_softmax(x, axis=1)
    xent = jnp.mean(-jnp.sum(logp * onehot, axis=1))
    probs = jax.nn.softmax(x, axis=1)
    inter = jnp.sum(probs * onehot, axis=-1)
    psum = jnp.sum(probs, axis=-1)
    tsum = jnp.sum(onehot, axis=-1)
    dice = jnp.mean((2.0 * inter + eps) / (psum + tsum + eps))
    combo = dice_factor * (1.0 - dice) + xent_factor * xent

    s = samples.reshape(S, B, C, V)
    logp_s = jax.nn.log_softmax(s, axis=2)
    per_sb = jnp.sum(jnp.sum(logp_s * onehot[None], axis=2), axis=-1)   # (S, B)
    loglik = jnp.mean(_logsumexp(per_sb, axis=0) - jnp.log(float(S)))
    mc_loss = -loglik / float(V)
    return combo + mc_loss * xent_factor * (S - 1.0) / S


if __name__ == "__main__":
    key = jax.random.PRNGKey(0)
    k_mean, k_samp, k_tgt = jax.random.split(key, 3)

    S, B, C, H, W = 8, 2, 4, 16, 16
    logit_mean = jax.random.normal(k_mean, (B, C, H, W), dtype=jnp.float32)
    logit_samples = logit_mean[None] + 0.5 * jax.random.normal(
        k_samp, (S, B, C, H, W), dtype=jnp.float32)
    target = jax.random.randint(k_tgt, (B, H, W), 0, C, dtype=jnp.int32)

    results = (logit_mean, logit_samples)
    out = ssn_combined_dice_xent_and_mc_loss(results, target)
    out = jax.block_until_ready(out)

    ref = _reference_loss(results, target)
    assert jnp.allclose(out, ref, rtol=1e-4, atol=1e-4), (out, ref)

    print("KERNEL_OK")
</pallas_src>

<mosaic_0001>
module attributes {stable_mosaic.version = 11 : i64} {
  func.func @_ssn_loss_kernel(%arg0: i32, %arg1: i32, %arg2: memref<1x4x8x128xf32, #tpu.memory_space<vmem>>, %arg3: memref<8x1x4x8x128xf32, #tpu.memory_space<vmem>>, %arg4: memref<1x8x128xi32, #tpu.memory_space<vmem>>, %arg5: memref<1x8x128xf32, #tpu.memory_space<vmem>>, %arg6: memref<1x4x8x128xf32, #tpu.memory_space<vmem>>, %arg7: memref<1x4x8x128xf32, #tpu.memory_space<vmem>>, %arg8: memref<1x4x8x128xf32, #tpu.memory_space<vmem>>, %arg9: memref<1x8x8x128xf32, #tpu.memory_space<vmem>>) attributes {dimension_semantics = [#tpu.dimension_semantics<parallel>, #tpu.dimension_semantics<arbitrary>], iteration_bounds = array<i64: 2, 1>, scalar_prefetch = 0 : i64, scratch_operands = 0 : i64, tpu.core_type = #tpu.core_type<tc>, window_params = [{transform_indices = @transform_0, window_bounds = array<i64: 1, 4, 8, 128>}, {transform_indices = @transform_1, window_bounds = array<i64: 8, 1, 4, 8, 128>}, {transform_indices = @transform_2, window_bounds = array<i64: 1, 8, 128>}, {transform_indices = @transform_3, window_bounds = array<i64: 1, 8, 128>}, {transform_indices = @transform_4, window_bounds = array<i64: 1, 4, 8, 128>}, {transform_indices = @transform_5, window_bounds = array<i64: 1, 4, 8, 128>}, {transform_indices = @transform_6, window_bounds = array<i64: 1, 4, 8, 128>}, {transform_indices = @transform_7, window_bounds = array<i64: 1, 8, 8, 128>}]} {
    %c0_i32 = arith.constant 0 : i32
    %0 = arith.cmpi eq, %arg1, %c0_i32 : i32
    %1 = arith.extui %0 : i1 to i32
    %c0_i32_0 = arith.constant 0 : i32
    %2 = arith.cmpi ne, %1, %c0_i32_0 : i32
    scf.if %2 {
      %cst_173 = arith.constant 0.000000e+00 : f32
      %242 = vector.broadcast %cst_173 : f32 to vector<8x128xf32>
      %c0_174 = arith.constant 0 : index
      %c0_175 = arith.constant 0 : index
      %c0_176 = arith.constant 0 : index
      %243 = vector.load %arg5[%c0_174, %c0_175, %c0_176] : memref<1x8x128xf32, #tpu.memory_space<vmem>>, vector<1x8x128xf32>
      %244 = vector.shape_cast %243 : vector<1x8x128xf32> to vector<8x128xf32>
      %245 = vector.shape_cast %242 : vector<8x128xf32> to vector<1x8x128xf32>
      tpu.vector_store %arg5[%c0_174, %c0_175, %c0_176], %245 {strides = array<i32>} : memref<1x8x128xf32, #tpu.memory_space<vmem>>, vector<1x8x128xf32>,
      %cst_177 = arith.constant 0.000000e+00 : f32
      %246 = vector.broadcast %cst_177 : f32 to vector<4x8x128xf32>
      %c0_178 = arith.constant 0 : index
      %c0_179 = arith.constant 0 : index
      %c0_180 = arith.constant 0 : index
      %c0_181 = arith.constant 0 : index
      %247 = vector.load %arg6[%c0_178, %c0_179, %c0_180, %c0_181] : memref<1x4x8x128xf32, #tpu.memory_space<vmem>>, vector<1x4x8x128xf32>
      %248 = vector.shape_cast %247 : vector<1x4x8x128xf32> to vector<4x8x128xf32>
      %249 = vector.shape_cast %246 : vector<4x8x128xf32> to vector<1x4x8x128xf32>
      tpu.vector_store %arg6[%c0_178, %c0_179, %c0_180, %c0_181], %249 {strides = array<i32>} : memref<1x4x8x128xf32, #tpu.memory_space<vmem>>, vector<1x4x8x128xf32>,
      %cst_182 = arith.constant 0.000000e+00 : f32
      %250 = vector.broadcast %cst_182 : f32 to vector<4x8x128xf32>
      %c0_183 = arith.constant 0 : index
      %c0_184 = arith.constant 0 : index
      %c0_185 = arith.constant 0 : index
      %c0_186 = arith.constant 0 : index
      %251 = vector.load %arg7[%c0_183, %c0_184, %c0_185, %c0_186] : memref<1x4x8x128xf32, #tpu.memory_space<vmem>>, vector<1x4x8x128xf32>
      %252 = vector.shape_cast %251 : vector<1x4x8x128xf32> to vector<4x8x128xf32>
      %253 = vector.shape_cast %250 : vector<4x8x128xf32> to vector<1x4x8x128xf32>
      tpu.vector_store %arg7[%c0_183, %c0_184, %c0_185, %c0_186], %253 {strides = array<i32>} : memref<1x4x8x128xf32, #tpu.memory_space<vmem>>, vector<1x4x8x128xf32>,
      %cst_187 = arith.constant 0.000000e+00 : f32
      %254 = vector.broadcast %cst_187 : f32 to vector<4x8x128xf32>
      %c0_188 = arith.constant 0 : index
      %c0_189 = arith.constant 0 : index
      %c0_190 = arith.constant 0 : index
      %c0_191 = arith.constant 0 : index
      %255 = vector.load %arg8[%c0_188, %c0_189, %c0_190, %c0_191] : memref<1x4x8x128xf32, #tpu.memory_space<vmem>>, vector<1x4x8x128xf32>
      %256 = vector.shape_cast %255 : vector<1x4x8x128xf32> to vector<4x8x128xf32>
      %257 = vector.shape_cast %254 : vector<4x8x128xf32> to vector<1x4x8x128xf32>
      tpu.vector_store %arg8[%c0_188, %c0_189, %c0_190, %c0_191], %257 {strides = array<i32>} : memref<1x4x8x128xf32, #tpu.memory_space<vmem>>, vector<1x4x8x128xf32>,
      %cst_192 = arith.constant 0.000000e+00 : f32
      %258 = vector.broadcast %cst_192 : f32 to vector<8x8x128xf32>
      %c0_193 = arith.constant 0 : index
      %c0_194 = arith.constant 0 : index
      %c0_195 = arith.constant 0 : index
      %c0_196 = arith.constant 0 : index
      %259 = vector.load %arg9[%c0_193, %c0_194, %c0_195, %c0_196] : memref<1x8x8x128xf32, #tpu.memory_space<vmem>>, vector<1x8x8x128xf32>
      %260 = vector.shape_cast %259 : vector<1x8x8x128xf32> to vector<8x8x128xf32>
      %261 = vector.shape_cast %258 : vector<8x8x128xf32> to vector<1x8x8x128xf32>
      tpu.vector_store %arg9[%c0_193, %c0_194, %c0_195, %c0_196], %261 {strides = array<i32>} : memref<1x8x8x128xf32, #tpu.memory_space<vmem>>, vector<1x8x8x128xf32>,
    } else {
    }
    %c0 = arith.constant 0 : index
    %c0_1 = arith.constant 0 : index
    %c0_2 = arith.constant 0 : index
    %3 = vector.load %arg4[%c0, %c0_1, %c0_2] : memref<1x8x128xi32, #tpu.memory_space<vmem>>, vector<1x8x128xi32>
    %4 = vector.shape_cast %3 : vector<1x8x128xi32> to vector<8x128xi32>
    %c0_i32_3 = arith.constant 0 : i32
    %5 = vector.broadcast %c0_i32_3 : i32 to vector<8x128xi32>
    %6 = arith.cmpi sge, %4, %5 : vector<8x128xi32>
    %7 = arith.extui %6 : vector<8x128xi1> to vector<8x128xi32>
    %8 = arith.sitofp %7 : vector<8x128xi32> to vector<8x128xf32>
    %9 = tpu.iota {dimensions = array<i32: 0>} : vector<4x8x128xi32>
    %10 = vector.shape_cast %4 : vector<8x128xi32> to vector<1x8x128xi32>
    %11 = vector.broadcast %10 : vector<1x8x128xi32> to vector<4x8x128xi32>
    %12 = arith.cmpi eq, %11, %9 : vector<4x8x128xi32>
    %13 = arith.extui %12 : vector<4x8x128xi1> to vector<4x8x128xi32>
    %14 = arith.sitofp %13 : vector<4x8x128xi32> to vector<4x8x128xf32>
    %c0_4 = arith.constant 0 : index
    %c0_5 = arith.constant 0 : index
    %c0_6 = arith.constant 0 : index
    %c0_7 = arith.constant 0 : index
    %15 = vector.load %arg2[%c0_4, %c0_5, %c0_6, %c0_7] : memref<1x4x8x128xf32, #tpu.memory_space<vmem>>, vector<1x4x8x128xf32>
    %16 = vector.shape_cast %15 : vector<1x4x8x128xf32> to vector<4x8x128xf32>
    %cst = arith.constant dense<0xFF800000> : vector<8x128xf32>
    %17 = vector.multi_reduction <maximumf>, %16, %cst [0] : vector<4x8x128xf32> to vector<8x128xf32>
    %18 = vector.shape_cast %17 : vector<8x128xf32> to vector<1x8x128xf32>
    %19 = vector.broadcast %18 : vector<1x8x128xf32> to vector<4x8x128xf32>
    %20 = arith.subf %16, %19 : vector<4x8x128xf32>
    %21 = math.exp %20 : vector<4x8x128xf32>
    %cst_8 = arith.constant dense<0.000000e+00> : vector<8x128xf32>
    %22 = vector.multi_reduction <add>, %21, %cst_8 [0] : vector<4x8x128xf32> to vector<8x128xf32>
    %23 = math.log %22 : vector<8x128xf32>
    %24 = arith.addf %17, %23 : vector<8x128xf32>
    %25 = arith.mulf %16, %14 : vector<4x8x128xf32>
    %cst_9 = arith.constant dense<0.000000e+00> : vector<8x128xf32>
    %26 = vector.multi_reduction <add>, %25, %cst_9 [0] : vector<4x8x128xf32> to vector<8x128xf32>
    %27 = arith.subf %24, %26 : vector<8x128xf32>
    %28 = arith.mulf %27, %8 : vector<8x128xf32>
    %29 = arith.divf %8, %22 : vector<8x128xf32>
    %30 = vector.shape_cast %29 : vector<8x128xf32> to vector<1x8x128xf32>
    %31 = vector.broadcast %30 : vector<1x8x128xf32> to vector<4x8x128xf32>
    %32 = arith.mulf %21, %31 : vector<4x8x128xf32>
    %c0_10 = arith.constant 0 : index
    %c0_11 = arith.constant 0 : index
    %c0_12 = arith.constant 0 : index
    %33 = vector.load %arg5[%c0_10, %c0_11, %c0_12] : memref<1x8x128xf32, #tpu.memory_space<vmem>>, vector<1x8x128xf32>
    %34 = vector.shape_cast %33 : vector<1x8x128xf32> to vector<8x128xf32>
    %35 = vector.shape_cast %28 : vector<8x128xf32> to vector<1x8x128xf32>
    %cst_13 = arith.constant dense<0.000000e+00> : vector<8x128xf32>
    %36 = vector.multi_reduction <add>, %35, %cst_13 [0] : vector<1x8x128xf32> to vector<8x128xf32>
    %37 = arith.addf %34, %36 : vector<8x128xf32>
    %c0_14 = arith.constant 0 : index
    %c0_15 = arith.constant 0 : index
    %c0_16 = arith.constant 0 : index
    %38 = vector.load %arg5[%c0_14, %c0_15, %c0_16] : memref<1x8x128xf32, #tpu.memory_space<vmem>>, vector<1x8x128xf32>
    %39 = vector.shape_cast %38 : vector<1x8x128xf32> to vector<8x128xf32>
    %40 = vector.shape_cast %37 : vector<8x128xf32> to vector<1x8x128xf32>
    tpu.vector_store %arg5[%c0_14, %c0_15, %c0_16], %40 {strides = array<i32>} : memref<1x8x128xf32, #tpu.memory_space<vmem>>, vector<1x8x128xf32>,
    %c0_17 = arith.constant 0 : index
    %c0_18 = arith.constant 0 : index
    %c0_19 = arith.constant 0 : index
    %c0_20 = arith.constant 0 : index
    %41 = vector.load %arg6[%c0_17, %c0_18, %c0_19, %c0_20] : memref<1x4x8x128xf32, #tpu.memory_space<vmem>>, vector<1x4x8x128xf32>
    %42 = vector.shape_cast %41 : vector<1x4x8x128xf32> to vector<4x8x128xf32>
    %43 = arith.mulf %32, %14 : vector<4x8x128xf32>
    %44 = vector.shape_cast %43 : vector<4x8x128xf32> to vector<4x1x8x128xf32>
    %cst_21 = arith.constant dense<0.000000e+00> : vector<4x8x128xf32>
    %45 = vector.multi_reduction <add>, %44, %cst_21 [1] : vector<4x1x8x128xf32> to vector<4x8x128xf32>
    %46 = arith.addf %42, %45 : vector<4x8x128xf32>
    %c0_22 = arith.constant 0 : index
    %c0_23 = arith.constant 0 : index
    %c0_24 = arith.constant 0 : index
    %c0_25 = arith.constant 0 : index
    %47 = vector.load %arg6[%c0_22, %c0_23, %c0_24, %c0_25] : memref<1x4x8x128xf32, #tpu.memory_space<vmem>>, vector<1x4x8x128xf32>
    %48 = vector.shape_cast %47 : vector<1x4x8x128xf32> to vector<4x8x128xf32>
    %49 = vector.shape_cast %46 : vector<4x8x128xf32> to vector<1x4x8x128xf32>
    tpu.vector_store %arg6[%c0_22, %c0_23, %c0_24, %c0_25], %49 {strides = array<i32>} : memref<1x4x8x128xf32, #tpu.memory_space<vmem>>, vector<1x4x8x128xf32>,
    %c0_26 = arith.constant 0 : index
    %c0_27 = arith.constant 0 : index
    %c0_28 = arith.constant 0 : index
    %c0_29 = arith.constant 0 : index
    %50 = vector.load %arg7[%c0_26, %c0_27, %c0_28, %c0_29] : memref<1x4x8x128xf32, #tpu.memory_space<vmem>>, vector<1x4x8x128xf32>
    %51 = vector.shape_cast %50 : vector<1x4x8x128xf32> to vector<4x8x128xf32>
    %52 = vector.shape_cast %32 : vector<4x8x128xf32> to vector<4x1x8x128xf32>
    %cst_30 = arith.constant dense<0.000000e+00> : vector<4x8x128xf32>
    %53 = vector.multi_reduction <add>, %52, %cst_30 [1] : vector<4x1x8x128xf32> to vector<4x8x128xf32>
    %54 = arith.addf %51, %53 : vector<4x8x128xf32>
    %c0_31 = arith.constant 0 : index
    %c0_32 = arith.constant 0 : index
    %c0_33 = arith.constant 0 : index
    %c0_34 = arith.constant 0 : index
    %55 = vector.load %arg7[%c0_31, %c0_32, %c0_33, %c0_34] : memref<1x4x8x128xf32, #tpu.memory_space<vmem>>, vector<1x4x8x128xf32>
    %56 = vector.shape_cast %55 : vector<1x4x8x128xf32> to vector<4x8x128xf32>
    %57 = vector.shape_cast %54 : vector<4x8x128xf32> to vector<1x4x8x128xf32>
    tpu.vector_store %arg7[%c0_31, %c0_32, %c0_33, %c0_34], %57 {strides = array<i32>} : memref<1x4x8x128xf32, #tpu.memory_space<vmem>>, vector<1x4x8x128xf32>,
    %c0_35 = arith.constant 0 : index
    %c0_36 = arith.constant 0 : index
    %c0_37 = arith.constant 0 : index
    %c0_38 = arith.constant 0 : index
    %58 = vector.load %arg8[%c0_35, %c0_36, %c0_37, %c0_38] : memref<1x4x8x128xf32, #tpu.memory_space<vmem>>, vector<1x4x8x128xf32>
    %59 = vector.shape_cast %58 : vector<1x4x8x128xf32> to vector<4x8x128xf32>
    %60 = vector.shape_cast %14 : vector<4x8x128xf32> to vector<4x1x8x128xf32>
    %cst_39 = arith.constant dense<0.000000e+00> : vector<4x8x128xf32>
    %61 = vector.multi_reduction <add>, %60, %cst_39 [1] : vector<4x1x8x128xf32> to vector<4x8x128xf32>
    %62 = arith.addf %59, %61 : vector<4x8x128xf32>
    %c0_40 = arith.constant 0 : index
    %c0_41 = arith.constant 0 : index
    %c0_42 = arith.constant 0 : index
    %c0_43 = arith.constant 0 : index
    %63 = vector.load %arg8[%c0_40, %c0_41, %c0_42, %c0_43] : memref<1x4x8x128xf32, #tpu.memory_space<vmem>>, vector<1x4x8x128xf32>
    %64 = vector.shape_cast %63 : vector<1x4x8x128xf32> to vector<4x8x128xf32>
    %65 = vector.shape_cast %62 : vector<4x8x128xf32> to vector<1x4x8x128xf32>
    tpu.vector_store %arg8[%c0_40, %c0_41, %c0_42, %c0_43], %65 {strides = array<i32>} : memref<1x4x8x128xf32, #tpu.memory_space<vmem>>, vector<1x4x8x128xf32>,
    %c0_44 = arith.constant 0 : index
    %c0_45 = arith.constant 0 : index
    %c0_46 = arith.constant 0 : index
    %c0_47 = arith.constant 0 : index
    %c0_48 = arith.constant 0 : index
    %66 = vector.load %arg3[%c0_44, %c0_45, %c0_46, %c0_47, %c0_48] : memref<8x1x4x8x128xf32, #tpu.memory_space<vmem>>, vector<1x1x4x8x128xf32>
    %67 = vector.shape_cast %66 : vector<1x1x4x8x128xf32> to vector<4x8x128xf32>
    %cst_49 = arith.constant dense<0xFF800000> : vector<8x128xf32>
    %68 = vector.multi_reduction <maximumf>, %67, %cst_49 [0] : vector<4x8x128xf32> to vector<8x128xf32>
    %69 = vector.shape_cast %68 : vector<8x128xf32> to vector<1x8x128xf32>
    %70 = vector.broadcast %69 : vector<1x8x128xf32> to vector<4x8x128xf32>
    %71 = arith.subf %67, %70 : vector<4x8x128xf32>
    %72 = math.exp %71 : vector<4x8x128xf32>
    %cst_50 = arith.constant dense<0.000000e+00> : vector<8x128xf32>
    %73 = vector.multi_reduction <add>, %72, %cst_50 [0] : vector<4x8x128xf32> to vector<8x128xf32>
    %74 = math.log %73 : vector<8x128xf32>
    %75 = arith.addf %68, %74 : vector<8x128xf32>
    %76 = arith.mulf %67, %14 : vector<4x8x128xf32>
    %cst_51 = arith.constant dense<0.000000e+00> : vector<8x128xf32>
    %77 = vector.multi_reduction <add>, %76, %cst_51 [0] : vector<4x8x128xf32> to vector<8x128xf32>
    %c0_52 = arith.constant 0 : index
    %c0_53 = arith.constant 0 : index
    %c0_54 = arith.constant 0 : index
    %c0_55 = arith.constant 0 : index
    %78 = vector.load %arg9[%c0_52, %c0_53, %c0_54, %c0_55] : memref<1x8x8x128xf32, #tpu.memory_space<vmem>>, vector<1x1x8x128xf32>
    %79 = vector.shape_cast %78 : vector<1x1x8x128xf32> to vector<8x128xf32>
    %80 = arith.subf %77, %75 : vector<8x128xf32>
    %81 = arith.mulf %80, %8 : vector<8x128xf32>
    %82 = vector.shape_cast %81 : vector<8x128xf32> to vector<1x8x128xf32>
    %cst_56 = arith.constant dense<0.000000e+00> : vector<8x128xf32>
    %83 = vector.multi_reduction <add>, %82, %cst_56 [0] : vector<1x8x128xf32> to vector<8x128xf32>
    %84 = arith.addf %79, %83 : vector<8x128xf32>
    %c0_57 = arith.constant 0 : index
    %c0_58 = arith.constant 0 : index
    %c0_59 = arith.constant 0 : index
    %c0_60 = arith.constant 0 : index
    %85 = vector.load %arg9[%c0_57, %c0_58, %c0_59, %c0_60] : memref<1x8x8x128xf32, #tpu.memory_space<vmem>>, vector<1x1x8x128xf32>
    %86 = vector.shape_cast %85 : vector<1x1x8x128xf32> to vector<8x128xf32>
    %87 = vector.shape_cast %84 : vector<8x128xf32> to vector<1x1x8x128xf32>
    tpu.vector_store %arg9[%c0_57, %c0_58, %c0_59, %c0_60], %87 {strides = array<i32>} : memref<1x8x8x128xf32, #tpu.memory_space<vmem>>, vector<1x1x8x128xf32>,
    %c1 = arith.constant 1 : index
    %c0_61 = arith.constant 0 : index
    %c0_62 = arith.constant 0 : index
    %c0_63 = arith.constant 0 : index
    %c0_64 = arith.constant 0 : index
    %88 = vector.load %arg3[%c1, %c0_61, %c0_62, %c0_63, %c0_64] : memref<8x1x4x8x128xf32, #tpu.memory_space<vmem>>, vector<1x1x4x8x128xf32>
    %89 = vector.shape_cast %88 : vector<1x1x4x8x128xf32> to vector<4x8x128xf32>
    %cst_65 = arith.constant dense<0xFF800000> : vector<8x128xf32>
    %90 = vector.multi_reduction <maximumf>, %89, %cst_65 [0] : vector<4x8x128xf32> to vector<8x128xf32>
    %91 = vector.shape_cast %90 : vector<8x128xf32> to vector<1x8x128xf32>
    %92 = vector.broadcast %91 : vector<1x8x128xf32> to vector<4x8x128xf32>
    %93 = arith.subf %89, %92 : vector<4x8x128xf32>
    %94 = math.exp %93 : vector<4x8x128xf32>
    %cst_66 = arith.constant dense<0.000000e+00> : vector<8x128xf32>
    %95 = vector.multi_reduction <add>, %94, %cst_66 [0] : vector<4x8x128xf32> to vector<8x128xf32>
    %96 = math.log %95 : vector<8x128xf32>
    %97 = arith.addf %90, %96 : vector<8x128xf32>
    %98 = arith.mulf %89, %14 : vector<4x8x128xf32>
    %cst_67 = arith.constant dense<0.000000e+00> : vector<8x128xf32>
    %99 = vector.multi_reduction <add>, %98, %cst_67 [0] : vector<4x8x128xf32> to vector<8x128xf32>
    %c0_68 = arith.constant 0 : index
    %c1_69 = arith.constant 1 : index
    %c0_70 = arith.constant 0 : index
    %c0_71 = arith.constant 0 : index
    %100 = vector.load %arg9[%c0_68, %c1_69, %c0_70, %c0_71] : memref<1x8x8x128xf32, #tpu.memory_space<vmem>>, vector<1x1x8x128xf32>
    %101 = vector.shape_cast %100 : vector<1x1x8x128xf32> to vector<8x128xf32>
    %102 = arith.subf %99, %97 : vector<8x128xf32>
    %103 = arith.mulf %102, %8 : vector<8x128xf32>
    %104 = vector.shape_cast %103 : vector<8x128xf32> to vector<1x8x128xf32>
    %cst_72 = arith.constant dense<0.000000e+00> : vector<8x128xf32>
    %105 = vector.multi_reduction <add>, %104, %cst_72 [0] : vector<1x8x128xf32> to vector<8x128xf32>
    %106 = arith.addf %101, %105 : vector<8x128xf32>
    %c0_73 = arith.constant 0 : index
    %c1_74 = arith.constant 1 : index
    %c0_75 = arith.constant 0 : index
    %c0_76 = arith.constant 0 : index
    %107 = vector.load %arg9[%c0_73, %c1_74, %c0_75, %c0_76] : memref<1x8x8x128xf32, #tpu.memory_space<vmem>>, vector<1x1x8x128xf32>
    %108 = vector.shape_cast %107 : vector<1x1x8x128xf32> to vector<8x128xf32>
    %109 = vector.shape_cast %106 : vector<8x128xf32> to vector<1x1x8x128xf32>
    tpu.vector_store %arg9[%c0_73, %c1_74, %c0_75, %c0_76], %109 {strides = array<i32>} : memref<1x8x8x128xf32, #tpu.memory_space<vmem>>, vector<1x1x8x128xf32>,
    %c2 = arith.constant 2 : index
    %c0_77 = arith.constant 0 : index
    %c0_78 = arith.constant 0 : index
    %c0_79 = arith.constant 0 : index
    %c0_80 = arith.constant 0 : index
    %110 = vector.load %arg3[%c2, %c0_77, %c0_78, %c0_79, %c0_80] : memref<8x1x4x8x128xf32, #tpu.memory_space<vmem>>, vector<1x1x4x8x128xf32>
    %111 = vector.shape_cast %110 : vector<1x1x4x8x128xf32> to vector<4x8x128xf32>
    %cst_81 = arith.constant dense<0xFF800000> : vector<8x128xf32>
    %112 = vector.multi_reduction <maximumf>, %111, %cst_81 [0] : vector<4x8x128xf32> to vector<8x128xf32>
    %113 = vector.shape_cast %112 : vector<8x128xf32> to vector<1x8x128xf32>
    %114 = vector.broadcast %113 : vector<1x8x128xf32> to vector<4x8x128xf32>
    %115 = arith.subf %111, %114 : vector<4x8x128xf32>
    %116 = math.exp %115 : vector<4x8x128xf32>
    %cst_82 = arith.constant dense<0.000000e+00> : vector<8x128xf32>
    %117 = vector.multi_reduction <add>, %116, %cst_82 [0] : vector<4x8x128xf32> to vector<8x128xf32>
    %118 = math.log %117 : vector<8x128xf32>
    %119 = arith.addf %112, %118 : vector<8x128xf32>
    %120 = arith.mulf %111, %14 : vector<4x8x128xf32>
    %cst_83 = arith.constant dense<0.000000e+00> : vector<8x128xf32>
    %121 = vector.multi_reduction <add>, %120, %cst_83 [0] : vector<4x8x128xf32> to vector<8x128xf32>
    %c0_84 = arith.constant 0 : index
    %c2_85 = arith.constant 2 : index
    %c0_86 = arith.constant 0 : index
    %c0_87 = arith.constant 0 : index
    %122 = vector.load %arg9[%c0_84, %c2_85, %c0_86, %c0_87] : memref<1x8x8x128xf32, #tpu.memory_space<vmem>>, vector<1x1x8x128xf32>
    %123 = vector.shape_cast %122 : vector<1x1x8x128xf32> to vector<8x128xf32>
    %124 = arith.subf %121, %119 : vector<8x128xf32>
    %125 = arith.mulf %124, %8 : vector<8x128xf32>
    %126 = vector.shape_cast %125 : vector<8x128xf32> to vector<1x8x128xf32>
    %cst_88 = arith.constant dense<0.000000e+00> : vector<8x128xf32>
    %127 = vector.multi_reduction <add>, %126, %cst_88 [0] : vector<1x8x128xf32> to vector<8x128xf32>
    %128 = arith.addf %123, %127 : vector<8x128xf32>
    %c0_89 = arith.constant 0 : index
    %c2_90 = arith.constant 2 : index
    %c0_91 = arith.constant 0 : index
    %c0_92 = arith.constant 0 : index
    %129 = vector.load %arg9[%c0_89, %c2_90, %c0_91, %c0_92] : memref<1x8x8x128xf32, #tpu.memory_space<vmem>>, vector<1x1x8x128xf32>
    %130 = vector.shape_cast %129 : vector<1x1x8x128xf32> to vector<8x128xf32>
    %131 = vector.shape_cast %128 : vector<8x128xf32> to vector<1x1x8x128xf32>
    tpu.vector_store %arg9[%c0_89, %c2_90, %c0_91, %c0_92], %131 {strides = array<i32>} : memref<1x8x8x128xf32, #tpu.memory_space<vmem>>, vector<1x1x8x128xf32>,
    %c3 = arith.constant 3 : index
    %c0_93 = arith.constant 0 : index
    %c0_94 = arith.constant 0 : index
    %c0_95 = arith.constant 0 : index
    %c0_96 = arith.constant 0 : index
    %132 = vector.load %arg3[%c3, %c0_93, %c0_94, %c0_95, %c0_96] : memref<8x1x4x8x128xf32, #tpu.memory_space<vmem>>, vector<1x1x4x8x128xf32>
    %133 = vector.shape_cast %132 : vector<1x1x4x8x128xf32> to vector<4x8x128xf32>
    %cst_97 = arith.constant dense<0xFF800000> : vector<8x128xf32>
    %134 = vector.multi_reduction <maximumf>, %133, %cst_97 [0] : vector<4x8x128xf32> to vector<8x128xf32>
    %135 = vector.shape_cast %134 : vector<8x128xf32> to vector<1x8x128xf32>
    %136 = vector.broadcast %135 : vector<1x8x128xf32> to vector<4x8x128xf32>
    %137 = arith.subf %133, %136 : vector<4x8x128xf32>
    %138 = math.exp %137 : vector<4x8x128xf32>
    %cst_98 = arith.constant dense<0.000000e+00> : vector<8x128xf32>
    %139 = vector.multi_reduction <add>, %138, %cst_98 [0] : vector<4x8x128xf32> to vector<8x128xf32>
    %140 = math.log %139 : vector<8x128xf32>
    %141 = arith.addf %134, %140 : vector<8x128xf32>
    %142 = arith.mulf %133, %14 : vector<4x8x128xf32>
    %cst_99 = arith.constant dense<0.000000e+00> : vector<8x128xf32>
    %143 = vector.multi_reduction <add>, %142, %cst_99 [0] : vector<4x8x128xf32> to vector<8x128xf32>
    %c0_100 = arith.constant 0 : index
    %c3_101 = arith.constant 3 : index
    %c0_102 = arith.constant 0 : index
    %c0_103 = arith.constant 0 : index
    %144 = vector.load %arg9[%c0_100, %c3_101, %c0_102, %c0_103] : memref<1x8x8x128xf32, #tpu.memory_space<vmem>>, vector<1x1x8x128xf32>
    %145 = vector.shape_cast %144 : vector<1x1x8x128xf32> to vector<8x128xf32>
    %146 = arith.subf %143, %141 : vector<8x128xf32>
    %147 = arith.mulf %146, %8 : vector<8x128xf32>
    %148 = vector.shape_cast %147 : vector<8x128xf32> to vector<1x8x128xf32>
    %cst_104 = arith.constant dense<0.000000e+00> : vector<8x128xf32>
    %149 = vector.multi_reduction <add>, %148, %cst_104 [0] : vector<1x8x128xf32> to vector<8x128xf32>
    %150 = arith.addf %145, %149 : vector<8x128xf32>
    %c0_105 = arith.constant 0 : index
    %c3_106 = arith.constant 3 : index
    %c0_107 = arith.constant 0 : index
    %c0_108 = arith.constant 0 : index
    %151 = vector.load %arg9[%c0_105, %c3_106, %c0_107, %c0_108] : memref<1x8x8x128xf32, #tpu.memory_space<vmem>>, vector<1x1x8x128xf32>
    %152 = vector.shape_cast %151 : vector<1x1x8x128xf32> to vector<8x128xf32>
    %153 = vector.shape_cast %150 : vector<8x128xf32> to vector<1x1x8x128xf32>
    tpu.vector_store %arg9[%c0_105, %c3_106, %c0_107, %c0_108], %153 {strides = array<i32>} : memref<1x8x8x128xf32, #tpu.memory_space<vmem>>, vector<1x1x8x128xf32>,
    %c4 = arith.constant 4 : index
    %c0_109 = arith.constant 0 : index
    %c0_110 = arith.constant 0 : index
    %c0_111 = arith.constant 0 : index
    %c0_112 = arith.constant 0 : index
    %154 = vector.load %arg3[%c4, %c0_109, %c0_110, %c0_111, %c0_112] : memref<8x1x4x8x128xf32, #tpu.memory_space<vmem>>, vector<1x1x4x8x128xf32>
    %155 = vector.shape_cast %154 : vector<1x1x4x8x128xf32> to vector<4x8x128xf32>
    %cst_113 = arith.constant dense<0xFF800000> : vector<8x128xf32>
    %156 = vector.multi_reduction <maximumf>, %155, %cst_113 [0] : vector<4x8x128xf32> to vector<8x128xf32>
    %157 = vector.shape_cast %156 : vector<8x128xf32> to vector<1x8x128xf32>
    %158 = vector.broadcast %157 : vector<1x8x128xf32> to vector<4x8x128xf32>
    %159 = arith.subf %155, %158 : vector<4x8x128xf32>
    %160 = math.exp %159 : vector<4x8x128xf32>
    %cst_114 = arith.constant dense<0.000000e+00> : vector<8x128xf32>
    %161 = vector.multi_reduction <add>, %160, %cst_114 [0] : vector<4x8x128xf32> to vector<8x128xf32>
    %162 = math.log %161 : vector<8x128xf32>
    %163 = arith.addf %156, %162 : vector<8x128xf32>
    %164 = arith.mulf %155, %14 : vector<4x8x128xf32>
    %cst_115 = arith.constant dense<0.000000e+00> : vector<8x128xf32>
    %165 = vector.multi_reduction <add>, %164, %cst_115 [0] : vector<4x8x128xf32> to vector<8x128xf32>
    %c0_116 = arith.constant 0 : index
    %c4_117 = arith.constant 4 : index
    %c0_118 = arith.constant 0 : index
    %c0_119 = arith.constant 0 : index
    %166 = vector.load %arg9[%c0_116, %c4_117, %c0_118, %c0_119] : memref<1x8x8x128xf32, #tpu.memory_space<vmem>>, vector<1x1x8x128xf32>
    %167 = vector.shape_cast %166 : vector<1x1x8x128xf32> to vector<8x128xf32>
    %168 = arith.subf %165, %163 : vector<8x128xf32>
    %169 = arith.mulf %168, %8 : vector<8x128xf32>
    %170 = vector.shape_cast %169 : vector<8x128xf32> to vector<1x8x128xf32>
    %cst_120 = arith.constant dense<0.000000e+00> : vector<8x128xf32>
    %171 = vector.multi_reduction <add>, %170, %cst_120 [0] : vector<1x8x128xf32> to vector<8x128xf32>
    %172 = arith.addf %167, %171 : vector<8x128xf32>
    %c0_121 = arith.constant 0 : index
    %c4_122 = arith.constant 4 : index
    %c0_123 = arith.constant 0 : index
    %c0_124 = arith.constant 0 : index
    %173 = vector.load %arg9[%c0_121, %c4_122, %c0_123, %c0_124] : memref<1x8x8x128xf32, #tpu.memory_space<vmem>>, vector<1x1x8x128xf32>
    %174 = vector.shape_cast %173 : vector<1x1x8x128xf32> to vector<8x128xf32>
    %175 = vector.shape_cast %172 : vector<8x128xf32> to vector<1x1x8x128xf32>
    tpu.vector_store %arg9[%c0_121, %c4_122, %c0_123, %c0_124], %175 {strides = array<i32>} : memref<1x8x8x128xf32, #tpu.memory_space<vmem>>, vector<1x1x8x128xf32>,
    %c5 = arith.constant 5 : index
    %c0_125 = arith.constant 0 : index
    %c0_126 = arith.constant 0 : index
    %c0_127 = arith.constant 0 : index
    %c0_128 = arith.constant 0 : index
    %176 = vector.load %arg3[%c5, %c0_125, %c0_126, %c0_127, %c0_128] : memref<8x1x4x8x128xf32, #tpu.memory_space<vmem>>, vector<1x1x4x8x128xf32>
    %177 = vector.shape_cast %176 : vector<1x1x4x8x128xf32> to vector<4x8x128xf32>
    %cst_129 = arith.constant dense<0xFF800000> : vector<8x128xf32>
    %178 = vector.multi_reduction <maximumf>, %177, %cst_129 [0] : vector<4x8x128xf32> to vector<8x128xf32>
    %179 = vector.shape_cast %178 : vector<8x128xf32> to vector<1x8x128xf32>
    %180 = vector.broadcast %179 : vector<1x8x128xf32> to vector<4x8x128xf32>
    %181 = arith.subf %177, %180 : vector<4x8x128xf32>
    %182 = math.exp %181 : vector<4x8x128xf32>
    %cst_130 = arith.constant dense<0.000000e+00> : vector<8x128xf32>
    %183 = vector.multi_reduction <add>, %182, %cst_130 [0] : vector<4x8x128xf32> to vector<8x128xf32>
    %184 = math.log %183 : vector<8x128xf32>
    %185 = arith.addf %178, %184 : vector<8x128xf32>
    %186 = arith.mulf %177, %14 : vector<4x8x128xf32>
    %cst_131 = arith.constant dense<0.000000e+00> : vector<8x128xf32>
    %187 = vector.multi_reduction <add>, %186, %cst_131 [0] : vector<4x8x128xf32> to vector<8x128xf32>
    %c0_132 = arith.constant 0 : index
    %c5_133 = arith.constant 5 : index
    %c0_134 = arith.constant 0 : index
    %c0_135 = arith.constant 0 : index
    %188 = vector.load %arg9[%c0_132, %c5_133, %c0_134, %c0_135] : memref<1x8x8x128xf32, #tpu.memory_space<vmem>>, vector<1x1x8x128xf32>
    %189 = vector.shape_cast %188 : vector<1x1x8x128xf32> to vector<8x128xf32>
    %190 = arith.subf %187, %185 : vector<8x128xf32>
    %191 = arith.mulf %190, %8 : vector<8x128xf32>
    %192 = vector.shape_cast %191 : vector<8x128xf32> to vector<1x8x128xf32>
    %cst_136 = arith.constant dense<0.000000e+00> : vector<8x128xf32>
    %193 = vector.multi_reduction <add>, %192, %cst_136 [0] : vector<1x8x128xf32> to vector<8x128xf32>
    %194 = arith.addf %189, %193 : vector<8x128xf32>
    %c0_137 = arith.constant 0 : index
    %c5_138 = arith.constant 5 : index
    %c0_139 = arith.constant 0 : index
    %c0_140 = arith.constant 0 : index
    %195 = vector.load %arg9[%c0_137, %c5_138, %c0_139, %c0_140] : memref<1x8x8x128xf32, #tpu.memory_space<vmem>>, vector<1x1x8x128xf32>
    %196 = vector.shape_cast %195 : vector<1x1x8x128xf32> to vector<8x128xf32>
    %197 = vector.shape_cast %194 : vector<8x128xf32> to vector<1x1x8x128xf32>
    tpu.vector_store %arg9[%c0_137, %c5_138, %c0_139, %c0_140], %197 {strides = array<i32>} : memref<1x8x8x128xf32, #tpu.memory_space<vmem>>, vector<1x1x8x128xf32>,
    %c6 = arith.constant 6 : index
    %c0_141 = arith.constant 0 : index
    %c0_142 = arith.constant 0 : index
    %c0_143 = arith.constant 0 : index
    %c0_144 = arith.constant 0 : index
    %198 = vector.load %arg3[%c6, %c0_141, %c0_142, %c0_143, %c0_144] : memref<8x1x4x8x128xf32, #tpu.memory_space<vmem>>, vector<1x1x4x8x128xf32>
    %199 = vector.shape_cast %198 : vector<1x1x4x8x128xf32> to vector<4x8x128xf32>
    %cst_145 = arith.constant dense<0xFF800000> : vector<8x128xf32>
    %200 = vector.multi_reduction <maximumf>, %199, %cst_145 [0] : vector<4x8x128xf32> to vector<8x128xf32>
    %201 = vector.shape_cast %200 : vector<8x128xf32> to vector<1x8x128xf32>
    %202 = vector.broadcast %201 : vector<1x8x128xf32> to vector<4x8x128xf32>
    %203 = arith.subf %199, %202 : vector<4x8x128xf32>
    %204 = math.exp %203 : vector<4x8x128xf32>
    %cst_146 = arith.constant dense<0.000000e+00> : vector<8x128xf32>
    %205 = vector.multi_reduction <add>, %204, %cst_146 [0] : vector<4x8x128xf32> to vector<8x128xf32>
    %206 = math.log %205 : vector<8x128xf32>
    %207 = arith.addf %200, %206 : vector<8x128xf32>
    %208 = arith.mulf %199, %14 : vector<4x8x128xf32>
    %cst_147 = arith.constant dense<0.000000e+00> : vector<8x128xf32>
    %209 = vector.multi_reduction <add>, %208, %cst_147 [0] : vector<4x8x128xf32> to vector<8x128xf32>
    %c0_148 = arith.constant 0 : index
    %c6_149 = arith.constant 6 : index
    %c0_150 = arith.constant 0 : index
    %c0_151 = arith.constant 0 : index
    %210 = vector.load %arg9[%c0_148, %c6_149, %c0_150, %c0_151] : memref<1x8x8x128xf32, #tpu.memory_space<vmem>>, vector<1x1x8x128xf32>
    %211 = vector.shape_cast %210 : vector<1x1x8x128xf32> to vector<8x128xf32>
    %212 = arith.subf %209, %207 : vector<8x128xf32>
    %213 = arith.mulf %212, %8 : vector<8x128xf32>
    %214 = vector.shape_cast %213 : vector<8x128xf32> to vector<1x8x128xf32>
    %cst_152 = arith.constant dense<0.000000e+00> : vector<8x128xf32>
    %215 = vector.multi_reduction <add>, %214, %cst_152 [0] : vector<1x8x128xf32> to vector<8x128xf32>
    %216 = arith.addf %211, %215 : vector<8x128xf32>
    %c0_153 = arith.constant 0 : index
    %c6_154 = arith.constant 6 : index
    %c0_155 = arith.constant 0 : index
    %c0_156 = arith.constant 0 : index
    %217 = vector.load %arg9[%c0_153, %c6_154, %c0_155, %c0_156] : memref<1x8x8x128xf32, #tpu.memory_space<vmem>>, vector<1x1x8x128xf32>
    %218 = vector.shape_cast %217 : vector<1x1x8x128xf32> to vector<8x128xf32>
    %219 = vector.shape_cast %216 : vector<8x128xf32> to vector<1x1x8x128xf32>
    tpu.vector_store %arg9[%c0_153, %c6_154, %c0_155, %c0_156], %219 {strides = array<i32>} : memref<1x8x8x128xf32, #tpu.memory_space<vmem>>, vector<1x1x8x128xf32>,
    %c7 = arith.constant 7 : index
    %c0_157 = arith.constant 0 : index
    %c0_158 = arith.constant 0 : index
    %c0_159 = arith.constant 0 : index
    %c0_160 = arith.constant 0 : index
    %220 = vector.load %arg3[%c7, %c0_157, %c0_158, %c0_159, %c0_160] : memref<8x1x4x8x128xf32, #tpu.memory_space<vmem>>, vector<1x1x4x8x128xf32>
    %221 = vector.shape_cast %220 : vector<1x1x4x8x128xf32> to vector<4x8x128xf32>
    %cst_161 = arith.constant dense<0xFF800000> : vector<8x128xf32>
    %222 = vector.multi_reduction <maximumf>, %221, %cst_161 [0] : vector<4x8x128xf32> to vector<8x128xf32>
    %223 = vector.shape_cast %222 : vector<8x128xf32> to vector<1x8x128xf32>
    %224 = vector.broadcast %223 : vector<1x8x128xf32> to vector<4x8x128xf32>
    %225 = arith.subf %221, %224 : vector<4x8x128xf32>
    %226 = math.exp %225 : vector<4x8x128xf32>
    %cst_162 = arith.constant dense<0.000000e+00> : vector<8x128xf32>
    %227 = vector.multi_reduction <add>, %226, %cst_162 [0] : vector<4x8x128xf32> to vector<8x128xf32>
    %228 = math.log %227 : vector<8x128xf32>
    %229 = arith.addf %222, %228 : vector<8x128xf32>
    %230 = arith.mulf %221, %14 : vector<4x8x128xf32>
    %cst_163 = arith.constant dense<0.000000e+00> : vector<8x128xf32>
    %231 = vector.multi_reduction <add>, %230, %cst_163 [0] : vector<4x8x128xf32> to vector<8x128xf32>
    %c0_164 = arith.constant 0 : index
    %c7_165 = arith.constant 7 : index
    %c0_166 = arith.constant 0 : index
    %c0_167 = arith.constant 0 : index
    %232 = vector.load %arg9[%c0_164, %c7_165, %c0_166, %c0_167] : memref<1x8x8x128xf32, #tpu.memory_space<vmem>>, vector<1x1x8x128xf32>
    %233 = vector.shape_cast %232 : vector<1x1x8x128xf32> to vector<8x128xf32>
    %234 = arith.subf %231, %229 : vector<8x128xf32>
    %235 = arith.mulf %234, %8 : vector<8x128xf32>
    %236 = vector.shape_cast %235 : vector<8x128xf32> to vector<1x8x128xf32>
    %cst_168 = arith.constant dense<0.000000e+00> : vector<8x128xf32>
    %237 = vector.multi_reduction <add>, %236, %cst_168 [0] : vector<1x8x128xf32> to vector<8x128xf32>
    %238 = arith.addf %233, %237 : vector<8x128xf32>
    %c0_169 = arith.constant 0 : index
    %c7_170 = arith.constant 7 : index
    %c0_171 = arith.constant 0 : index
    %c0_172 = arith.constant 0 : index
    %239 = vector.load %arg9[%c0_169, %c7_170, %c0_171, %c0_172] : memref<1x8x8x128xf32, #tpu.memory_space<vmem>>, vector<1x1x8x128xf32>
    %240 = vector.shape_cast %239 : vector<1x1x8x128xf32> to vector<8x128xf32>
    %241 = vector.shape_cast %238 : vector<8x128xf32> to vector<1x1x8x128xf32>
    tpu.vector_store %arg9[%c0_169, %c7_170, %c0_171, %c0_172], %241 {strides = array<i32>} : memref<1x8x8x128xf32, #tpu.memory_space<vmem>>, vector<1x1x8x128xf32>,
    return
  }
  func.func @transform_0(%arg0: i32, %arg1: i32) -> (i32, i32, i32, i32) {
    %c0_i32 = arith.constant 0 : i32
    %c0_i32_0 = arith.constant 0 : i32
    %c0_i32_1 = arith.constant 0 : i32
    return %arg0, %c0_i32, %arg1, %c0_i32_0 : i32, i32, i32, i32
  }
  func.func @transform_1(%arg0: i32, %arg1: i32) -> (i32, i32, i32, i32, i32) {
    %c0_i32 = arith.constant 0 : i32
    %c0_i32_0 = arith.constant 0 : i32
    %c0_i32_1 = arith.constant 0 : i32
    %c0_i32_2 = arith.constant 0 : i32
    return %c0_i32, %arg0, %c0_i32_0, %arg1, %c0_i32_1 : i32, i32, i32, i32, i32
  }
  func.func @transform_2(%arg0: i32, %arg1: i32) -> (i32, i32, i32) {
    %c0_i32 = arith.constant 0 : i32
    %c0_i32_0 = arith.constant 0 : i32
    return %arg0, %arg1, %c0_i32 : i32, i32, i32
  }
  func.func @transform_3(%arg0: i32, %arg1: i32) -> (i32, i32, i32) {
    %c0_i32 = arith.constant 0 : i32
    %c0_i32_0 = arith.constant 0 : i32
    %c0_i32_1 = arith.constant 0 : i32
    return %arg0, %c0_i32, %c0_i32_0 : i32, i32, i32
  }
  func.func @transform_4(%arg0: i32, %arg1: i32) -> (i32, i32, i32, i32) {
    %c0_i32 = arith.constant 0 : i32
    %c0_i32_0 = arith.constant 0 : i32
    %c0_i32_1 = arith.constant 0 : i32
    %c0_i32_2 = arith.constant 0 : i32
    return %arg0, %c0_i32, %c0_i32_0, %c0_i32_1 : i32, i32, i32, i32
  }
  func.func @transform_5(%arg0: i32, %arg1: i32) -> (i32, i32, i32, i32) {
    %c0_i32 = arith.constant 0 : i32
    %c0_i32_0 = arith.constant 0 : i32
    %c0_i32_1 = arith.constant 0 : i32
    %c0_i32_2 = arith.constant 0 : i32
    return %arg0, %c0_i32, %c0_i32_0, %c0_i32_1 : i32, i32, i32, i32
  }
  func.func @transform_6(%arg0: i32, %arg1: i32) -> (i32, i32, i32, i32) {
    %c0_i32 = arith.constant 0 : i32
    %c0_i32_0 = arith.constant 0 : i32
    %c0_i32_1 = arith.constant 0 : i32
    %c0_i32_2 = arith.constant 0 : i32
    return %arg0, %c0_i32, %c0_i32_0, %c0_i32_1 : i32, i32, i32, i32
  }
  func.func @transform_7(%arg0: i32, %arg1: i32) -> (i32, i32, i32, i32) {
    %c0_i32 = arith.constant 0 : i32
    %c0_i32_0 = arith.constant 0 : i32
    %c0_i32_1 = arith.constant 0 : i32
    %c0_i32_2 = arith.constant 0 : i32
    return %arg0, %c0_i32, %c0_i32_0, %c0_i32_1 : i32, i32, i32, i32
  }
}

</mosaic_0001>

<llo_original>
// kernel: tpu_custom_call.1
$region0: #{tpu_custom_call.1}
  #allocation0 [shape = 'u32[]', space=smem, size = 0x4, offset = 0x4, fixed_abs, tag = 'smem constant byte address 0x4 - core index']
  #allocation1 [shape = 'u32[144,128]{1,0:T(1,128)}', space=vmem, size = 0x12000, scoped, tag = 'internal scratch']
  #allocation15 [shape = 's32[]', space=sflag, size = 0x4, offset = 0, fixed_abs, tag = 'sflag constant byte address 0x0 - dummy sync flag']
  %s0 = inlined_call_operand.hbm [shape: f32[2,4,8,128], index: 0, kind: input, shape index: {}]
  %s1 = inlined_call_operand.hbm [shape: f32[8,2,4,8,128], index: 1, kind: input, shape index: {}]
  %s2 = inlined_call_operand.hbm [shape: s32[2,8,128], index: 2, kind: input, shape index: {}]
  %s3 = inlined_call_operand.hbm [shape: f32[2,8,128], index: 3, kind: output, shape index: {0}]
  %s4 = inlined_call_operand.hbm [shape: f32[2,4,8,128], index: 4, kind: output, shape index: {1}]
  %s5 = inlined_call_operand.hbm [shape: f32[2,4,8,128], index: 5, kind: output, shape index: {2}]
  %s6 = inlined_call_operand.hbm [shape: f32[2,4,8,128], index: 6, kind: output, shape index: {3}]
  %s7 = inlined_call_operand.hbm [shape: f32[2,8,8,128], index: 7, kind: output, shape index: {4}]
  %8 = xla_tuple %s3, %s4, %s5, %s6, %s7
  %s9 = sld [smem:[#allocation0]]
  $region93: #{tpu_custom_call.1} parent=0
    _
  %s11 = ssub.s32 1, %s9
  %s12 = scalar_select 0, %s11, %s9
  $region1: #{tpu_custom_call.1} parent=0
    #allocation2 [shape = 'u8[32768]{0}', space=vmem, size = 0x8000, scoped, tag = 'input window, operand 0']
    #allocation3 [shape = 's32[2]{0}', space=sflag, size = 0x8, scoped, tag = 'scoped memory for tpu_custom_call.1']
    #allocation4 [shape = 's32[2]{0}', space=sflag, size = 0x8, scoped, tag = 'scoped memory for tpu_custom_call.1']
    #allocation5 [shape = 'u8[262144]{0}', space=vmem, size = 0x40000, scoped, tag = 'input window, operand 1']
    #allocation6 [shape = 's32[2]{0}', space=sflag, size = 0x8, scoped, tag = 'scoped memory for tpu_custom_call.1']
    #allocation7 [shape = 'u8[8192]{0}', space=vmem, size = 0x2000, scoped, tag = 'input window, operand 2']
    #allocation8 [shape = 'u8[8192]{0}', space=vmem, size = 0x2000, scoped, tag = 'output window, operand 0']
    #allocation9 [shape = 'u8[32768]{0}', space=vmem, size = 0x8000, scoped, tag = 'output window, operand 1']
    #allocation10 [shape = 's32[2]{0}', space=sflag, size = 0x8, scoped, tag = 'scoped memory for tpu_custom_call.1']
    #allocation11 [shape = 'u8[32768]{0}', space=vmem, size = 0x8000, scoped, tag = 'output window, operand 2']
    #allocation12 [shape = 'u8[32768]{0}', space=vmem, size = 0x8000, scoped, tag = 'output window, operand 3']
    #allocation13 [shape = 's32[2]{0}', space=sflag, size = 0x8, scoped, tag = 'scoped memory for tpu_custom_call.1']
    #allocation14 [shape = 'u8[65536]{0}', space=vmem, size = 0x10000, scoped, tag = 'output window, operand 4']
    %13 = vsyncpa [#allocation3], 0
    %s14 = scalar_lea.sflag [#allocation3], 1
    %15 = vsyncpa %s14, 0
    %16 = vsyncpa [#allocation6], 0
    %s17 = scalar_lea.sflag [#allocation6], 1
    %18 = vsyncpa %s17, 0
    %19 = vsyncpa [#allocation4], 0
    %s20 = scalar_lea.sflag [#allocation4], 1
    %21 = vsyncpa %s20, 0
    %22 = vsyncpa [#allocation10], 0
    %s23 = scalar_lea.sflag [#allocation10], 1
    %24 = vsyncpa %s23, 0
    %25 = vsyncpa [#allocation13], 0
    %s26 = scalar_lea.sflag [#allocation13], 1
    %27 = vsyncpa %s26, 0
    loop: start=0, step=1, limit=4
    $region2: #{tpu_custom_call.1} parent=1 // loop_pre_header
      _
    $region3: #{tpu_custom_call.1} parent=1 // loop_header
      %s29 = sphi 0, %s33
      %p30 = scmp.ge.s32.totalorder %s29, 4
      %s36 = sphi 0, %s48
      %s37 = sphi 0, %s44
      %s38 = sphi 0, %s36
      %s39 = sphi 0, %s37
      %s40 = sphi 0, %s38
      %s41 = sphi 0, %s39
      %s53 = sphi 0, %s55
      %s56 = sphi 0, %s53
      %s57 = sphi 0, %s56
      %s73 = sphi 0, %s57
      %s81 = sphi 0, %s83
      %s84 = sphi 0, %s81
      %s85 = sphi 0, %s84
      %s101 = sphi 0, %s85
      %s109 = sphi 0, %s111
      %s112 = sphi 0, %s109
      %s113 = sphi 0, %s112
      %s129 = sphi 0, %s113
      %s135 = sphi 0, %s137
      %s138 = sphi 0, %s135
      %s139 = sphi 0, %s138
      %s155 = sphi 0, %s139
      %s161 = sphi 0, %s163
      %s164 = sphi 0, %s161
      %s165 = sphi 0, %s164
      %s181 = sphi 0, %s165
      %s187 = sphi 0, %s189
      %s190 = sphi 0, %s187
      %s191 = sphi 0, %s190
      %s207 = sphi 0, %s191
      %s213 = sphi 0, %s215
      %s216 = sphi 0, %s213
      %s217 = sphi 0, %s216
      %s233 = sphi 0, %s217
      %s239 = sphi 0, %s241
      %s242 = sphi 0, %s239
      %s243 = sphi 0, %s242
      %s259 = sphi 0, %s243
    $region4: #{tpu_custom_call.1} parent=1 // loop_header_branch
      %32 = sbr.rel (%p30) target = $region8
    $region5: #{tpu_custom_call.1} parent=1 // loop_body
      %s34 = ssub.s32 %s29, 1
      %s35 = ssub.s32 %s29, 2
      %s42 = sadd.s32 1, %s37
      %p43 = scmp.ge.s32.totalorder %s42, 1
      %s44 = scalar_select %p43, 0, %s42
      %s45 = sadd.s32 1, %s36
      %s46 = scalar_select %p43, %s45, %s36
      %p47 = scmp.ge.s32.totalorder %s46, 2
      %s48 = scalar_select %p47, 0, %s46
      %s49 = ssub.s32 %s36, %s48
      %s50 = ssub.s32 %s37, %s44
      %s51 = sor.u32 %s49, %s50
      %p52 = scmp.eq.s32.totalorder %s51, 0
      %s54 = sadd.s32 %s53, 1
      %s55 = scalar_select %p52, %s53, %s54
      %p58 = pneg %p52
      %p59 = scmp.eq.s32.totalorder %s29, 1
      %p60 = por %p58, %p59
      %p61 = scmp.ne.s32.totalorder %s53, %s56
      %p62 = scmp.eq.s32.totalorder %s29, 0
      %p63 = por %p61, %p62
      %p64 = scmp.ne.s32.totalorder %s53, %s56
      %p65 = scmp.eq.s32.totalorder %s34, 1
      %p66 = por %p64, %p65
      %p67 = scmp.ne.s32.totalorder %s56, %s57
      %p68 = scmp.eq.s32.totalorder %s34, 0
      %p69 = por %p67, %p68
      %p70 = scmp.ne.s32.totalorder %s56, %s57
      %p71 = scmp.eq.s32.totalorder %s35, 1
      %p72 = por %p70, %p71
      %p74 = scmp.ne.s32.totalorder %s57, %s73
      %p75 = scmp.eq.s32.totalorder %s35, 0
      %p76 = por %p74, %p75
      %s77 = ssub.s32 %s36, %s48
      %s78 = ssub.s32 %s37, %s44
      %s79 = sor.u32 %s77, %s78
      %p80 = scmp.eq.s32.totalorder %s79, 0
      %s82 = sadd.s32 %s81, 1
      %s83 = scalar_select %p80, %s81, %s82
      %p86 = pneg %p80
      %p87 = scmp.eq.s32.totalorder %s29, 1
      %p88 = por %p86, %p87
      %p89 = scmp.ne.s32.totalorder %s81, %s84
      %p90 = scmp.eq.s32.totalorder %s29, 0
      %p91 = por %p89, %p90
      %p92 = scmp.ne.s32.totalorder %s81, %s84
      %p93 = scmp.eq.s32.totalorder %s34, 1
      %p94 = por %p92, %p93
      %p95 = scmp.ne.s32.totalorder %s84, %s85
      %p96 = scmp.eq.s32.totalorder %s34, 0
      %p97 = por %p95, %p96
      %p98 = scmp.ne.s32.totalorder %s84, %s85
      %p99 = scmp.eq.s32.totalorder %s35, 1
      %p100 = por %p98, %p99
      %p102 = scmp.ne.s32.totalorder %s85, %s101
      %p103 = scmp.eq.s32.totalorder %s35, 0
      %p104 = por %p102, %p103
      %s105 = ssub.s32 %s36, %s48
      %s106 = ssub.s32 %s37, %s44
      %s107 = sor.u32 %s105, %s106
      %p108 = scmp.eq.s32.totalorder %s107, 0
      %s110 = sadd.s32 %s109, 1
      %s111 = scalar_select %p108, %s109, %s110
      %p114 = pneg %p108
      %p115 = scmp.eq.s32.totalorder %s29, 1
      %p116 = por %p114, %p115
      %p117 = scmp.ne.s32.totalorder %s109, %s112
      %p118 = scmp.eq.s32.totalorder %s29, 0
      %p119 = por %p117, %p118
      %p120 = scmp.ne.s32.totalorder %s109, %s112
      %p121 = scmp.eq.s32.totalorder %s34, 1
      %p122 = por %p120, %p121
      %p123 = scmp.ne.s32.totalorder %s112, %s113
      %p124 = scmp.eq.s32.totalorder %s34, 0
      %p125 = por %p123, %p124
      %p126 = scmp.ne.s32.totalorder %s112, %s113
      %p127 = scmp.eq.s32.totalorder %s35, 1
      %p128 = por %p126, %p127
      %p130 = scmp.ne.s32.totalorder %s113, %s129
      %p131 = scmp.eq.s32.totalorder %s35, 0
      %p132 = por %p130, %p131
      %s133 = ssub.s32 %s36, %s48
      %p134 = scmp.eq.s32.totalorder %s133, 0
      %s136 = sadd.s32 %s135, 1
      %s137 = scalar_select %p134, %s135, %s136
      %p140 = pneg %p134
      %p141 = scmp.eq.s32.totalorder %s29, 1
      %p142 = por %p140, %p141
      %p143 = scmp.ne.s32.totalorder %s135, %s138
      %p144 = scmp.eq.s32.totalorder %s29, 0
      %p145 = por %p143, %p144
      %p146 = scmp.ne.s32.totalorder %s135, %s138
      %p147 = scmp.eq.s32.totalorder %s34, 1
      %p148 = por %p146, %p147
      %p149 = scmp.ne.s32.totalorder %s138, %s139
      %p150 = scmp.eq.s32.totalorder %s34, 0
      %p151 = por %p149, %p150
      %p152 = scmp.ne.s32.totalorder %s138, %s139
      %p153 = scmp.eq.s32.totalorder %s35, 1
      %p154 = por %p152, %p153
      %p156 = scmp.ne.s32.totalorder %s139, %s155
      %p157 = scmp.eq.s32.totalorder %s35, 0
      %p158 = por %p156, %p157
      %s159 = ssub.s32 %s36, %s48
      %p160 = scmp.eq.s32.totalorder %s159, 0
      %s162 = sadd.s32 %s161, 1
      %s163 = scalar_select %p160, %s161, %s162
      %p166 = pneg %p160
      %p167 = scmp.eq.s32.totalorder %s29, 1
      %p168 = por %p166, %p167
      %p169 = scmp.ne.s32.totalorder %s161, %s164
      %p170 = scmp.eq.s32.totalorder %s29, 0
      %p171 = por %p169, %p170
      %p172 = scmp.ne.s32.totalorder %s161, %s164
      %p173 = scmp.eq.s32.totalorder %s34, 1
      %p174 = por %p172, %p173
      %p175 = scmp.ne.s32.totalorder %s164, %s165
      %p176 = scmp.eq.s32.totalorder %s34, 0
      %p177 = por %p175, %p176
      %p178 = scmp.ne.s32.totalorder %s164, %s165
      %p179 = scmp.eq.s32.totalorder %s35, 1
      %p180 = por %p178, %p179
      %p182 = scmp.ne.s32.totalorder %s165, %s181
      %p183 = scmp.eq.s32.totalorder %s35, 0
      %p184 = por %p182, %p183
      %s185 = ssub.s32 %s36, %s48
      %p186 = scmp.eq.s32.totalorder %s185, 0
      %s188 = sadd.s32 %s187, 1
      %s189 = scalar_select %p186, %s187, %s188
      %p192 = pneg %p186
      %p193 = scmp.eq.s32.totalorder %s29, 1
      %p194 = por %p192, %p193
      %p195 = scmp.ne.s32.totalorder %s187, %s190
      %p196 = scmp.eq.s32.totalorder %s29, 0
      %p197 = por %p195, %p196
      %p198 = scmp.ne.s32.totalorder %s187, %s190
      %p199 = scmp.eq.s32.totalorder %s34, 1
      %p200 = por %p198, %p199
      %p201 = scmp.ne.s32.totalorder %s190, %s191
      %p202 = scmp.eq.s32.totalorder %s34, 0
      %p203 = por %p201, %p202
      %p204 = scmp.ne.s32.totalorder %s190, %s191
      %p205 = scmp.eq.s32.totalorder %s35, 1
      %p206 = por %p204, %p205
      %p208 = scmp.ne.s32.totalorder %s191, %s207
      %p209 = scmp.eq.s32.totalorder %s35, 0
      %p210 = por %p208, %p209
      %s211 = ssub.s32 %s36, %s48
      %p212 = scmp.eq.s32.totalorder %s211, 0
      %s214 = sadd.s32 %s213, 1
      %s215 = scalar_select %p212, %s213, %s214
      %p218 = pneg %p212
      %p219 = scmp.eq.s32.totalorder %s29, 1
      %p220 = por %p218, %p219
      %p221 = scmp.ne.s32.totalorder %s213, %s216
      %p222 = scmp.eq.s32.totalorder %s29, 0
      %p223 = por %p221, %p222
      %p224 = scmp.ne.s32.totalorder %s213, %s216
      %p225 = scmp.eq.s32.totalorder %s34, 1
      %p226 = por %p224, %p225
      %p227 = scmp.ne.s32.totalorder %s216, %s217
      %p228 = scmp.eq.s32.totalorder %s34, 0
      %p229 = por %p227, %p228
      %p230 = scmp.ne.s32.totalorder %s216, %s217
      %p231 = scmp.eq.s32.totalorder %s35, 1
      %p232 = por %p230, %p231
      %p234 = scmp.ne.s32.totalorder %s217, %s233
      %p235 = scmp.eq.s32.totalorder %s35, 0
      %p236 = por %p234, %p235
      %s237 = ssub.s32 %s36, %s48
      %p238 = scmp.eq.s32.totalorder %s237, 0
      %s240 = sadd.s32 %s239, 1
      %s241 = scalar_select %p238, %s239, %s240
      %p244 = pneg %p238
      %p245 = scmp.eq.s32.totalorder %s29, 1
      %p246 = por %p244, %p245
      %p247 = scmp.ne.s32.totalorder %s239, %s242
      %p248 = scmp.eq.s32.totalorder %s29, 0
      %p249 = por %p247, %p248
      %p250 = scmp.ne.s32.totalorder %s239, %s242
      %p251 = scmp.eq.s32.totalorder %s34, 1
      %p252 = por %p250, %p251
      %p253 = scmp.ne.s32.totalorder %s242, %s243
      %p254 = scmp.eq.s32.totalorder %s34, 0
      %p255 = por %p253, %p254
      %p256 = scmp.ne.s32.totalorder %s242, %s243
      %p257 = scmp.eq.s32.totalorder %s35, 1
      %p258 = por %p256, %p257
      %p260 = scmp.ne.s32.totalorder %s243, %s259
      %p261 = scmp.eq.s32.totalorder %s35, 0
      %p262 = por %p260, %p261
      %p263 = scmp.le.s32.totalorder 1, %s29
      %p264 = scmp.lt.s32.totalorder %s29, 3
      %p265 = pnand %p263, %p264
      %p266 = pneg %p265
      // Predicated region
      $region9: #{tpu_custom_call.1} parent=5 // pred_check
        _
      $region10: #{tpu_custom_call.1} parent=5 // pred_check_branch
        %268 = sbr.rel (%p265) target = $region12
      $region11: #{tpu_custom_call.1} parent=5 // pred_region
        %s269 = ssub.s32 %s29, 1
      $region12: #{tpu_custom_call.1} parent=5 // pred_fallthru
        _
      %p270 = scmp.lt.s32.totalorder %s29, 2
      // Predicated region
      $region13: #{tpu_custom_call.1} parent=5 // pred_check
        %p271 = pneg %p270
      $region14: #{tpu_custom_call.1} parent=5 // pred_check_branch
        %273 = sbr.rel (%p271) target = $region16
      $region15: #{tpu_custom_call.1} parent=5 // pred_region
        // Predicated region
        $region17: #{tpu_custom_call.1} parent=15 // pred_check
          %p274 = pneg %p63
        $region18: #{tpu_custom_call.1} parent=15 // pred_check_branch
          %276 = sbr.rel (%p274) target = $region20
        $region19: #{tpu_custom_call.1} parent=15 // pred_region
          %s277 = sand.u32 %s53, 1
          %s278 = scalar_lea.sflag [#allocation3], %s277
          %s279 = sand.u32 %s53, 1
          %s280 = smul.addr %s279, 32
          %s281 = scalar_lea.vmem [#allocation2], %s280
          %s283 = ssub.s32 512, 512
          %284 = vsyncadd %s278, %s283
          %s285 = smul.addr %s36, 4
          %s286 = sadd.s32 %s37, %s285
          %s287 = smul.addr %s286, 128
          %s288 = scalar_lea.hbm %s0, %s287
          %s289 = sshll.u32 %s281, 4
          %s290 = int_to_ptr.vmem [resolvable:$true] %s289
          %295 = dma.hbm_to_vmem [thread:$0]  %s288, 512, %s290, %s278, 128, 128, 8
        $region20: #{tpu_custom_call.1} parent=15 // pred_fallthru
          _
        // Predicated region
        $region21: #{tpu_custom_call.1} parent=15 // pred_check
          %p296 = pneg %p91
        $region22: #{tpu_custom_call.1} parent=15 // pred_check_branch
          %298 = sbr.rel (%p296) target = $region24
        $region23: #{tpu_custom_call.1} parent=15 // pred_region
          #allocation16 [shape = 'u32[6]{0}', space=smem, size = 0x18, scoped, tag = 'DMA stride descriptor']
          %s299 = sand.u32 %s29, 1
          %s300 = scalar_lea.sflag [#allocation6], %s299
          %s301 = sand.u32 %s81, 1
          %s302 = smul.addr %s301, 256
          %s303 = scalar_lea.vmem [#allocation5], %s302
          %s305 = ssub.s32 4096, 4096
          %306 = vsyncadd %s300, %s305
          %s307 = smul.addr %s36, 4
          %s308 = sadd.s32 %s37, %s307
          %s309 = smul.addr %s308, 128
          %s310 = scalar_lea.hbm %s1, %s309
          %s312 = sshll.u32 1, 14
          %s313 = sxor.u32 4294967295, %s312
          %s315 = sld [smem:[#allocation0]]
          %s316 = sadd.s32 2, %s315
          %s318 = sshll.u32 7, 26
          %s319 = sxor.u32 4294967295, %s318
          %s320 = sand.u32 0, %s319
          %s321 = sshll.u32 %s316, 26
          %s322 = sor.u32 %s320, %s321
          %s323 = sshll.u32 %s303, 4
          %s324 = int_to_ptr.vmem [resolvable:$true] %s323
          %330 = sst [smem:[#allocation16]] 1024
          %s331 = scalar_lea.smem [#allocation16], 1
          %332 = sst [smem:[%s331]] 512
          %s333 = scalar_lea.smem [#allocation16], 2
          %334 = sst [smem:[%s333]] 4
          %s335 = scalar_lea.smem [#allocation16], 3
          %336 = sst [smem:[%s335]] 128
          %s337 = scalar_lea.smem [#allocation16], 4
          %338 = sst [smem:[%s337]] 128
          %s339 = scalar_lea.smem [#allocation16], 5
          %340 = sst [smem:[%s339]] 8
          %342 = dma.general %s310, 4096, %s324, %s300, 131072, [#allocation16], %s322, 0
        $region24: #{tpu_custom_call.1} parent=15 // pred_fallthru
          _
        // Predicated region
        $region25: #{tpu_custom_call.1} parent=15 // pred_check
          %p343 = pneg %p119
        $region26: #{tpu_custom_call.1} parent=15 // pred_check_branch
          %345 = sbr.rel (%p343) target = $region28
        $region27: #{tpu_custom_call.1} parent=15 // pred_region
          %s346 = sand.u32 %s29, 1
          %s347 = scalar_lea.sflag [#allocation6], %s346
          %s348 = sand.u32 %s109, 1
          %s349 = smul.addr %s348, 8
          %s350 = scalar_lea.vmem [#allocation7], %s349
          %s352 = ssub.s32 128, 128
          %353 = vsyncadd %s347, %s352
          %s354 = sadd.s32 %s37, %s36
          %s355 = smul.addr %s354, 128
          %s356 = scalar_lea.hbm %s2, %s355
          %s358 = sshll.u32 %s350, 4
          %s359 = int_to_ptr.vmem [resolvable:$true] %s358
          %361 = dma.hbm_to_vmem [thread:$0]  %s356, 128, %s359, %s347
        $region28: #{tpu_custom_call.1} parent=15 // pred_fallthru
          _
      $region16: #{tpu_custom_call.1} parent=5 // pred_fallthru
        _
      %p362 = scmp.le.s32.totalorder 1, %s29
      %p363 = scmp.lt.s32.totalorder %s29, 3
      %p364 = pnand %p362, %p363
      %p365 = pneg %p364
      // Predicated region
      $region29: #{tpu_custom_call.1} parent=5 // pred_check
        _
      $region30: #{tpu_custom_call.1} parent=5 // pred_check_branch
        %367 = sbr.rel (%p364) target = $region32
      $region31: #{tpu_custom_call.1} parent=5 // pred_region
        %s368 = ssub.s32 %s29, 1
        %s369 = sand.u32 %s56, 1
        %s370 = scalar_lea.sflag [#allocation3], %s369
        %s371 = sand.u32 %s56, 1
        %s372 = smul.addr %s371, 32
        %s373 = scalar_lea.vmem [#allocation2], %s372
        // Predicated region
        $region33: #{tpu_custom_call.1} parent=31 // pred_check
          %p374 = pneg %p69
        $region34: #{tpu_custom_call.1} parent=31 // pred_check_branch
          %376 = sbr.rel (%p374) target = $region36
        $region35: #{tpu_custom_call.1} parent=31 // pred_region
          %377 = dma.done %s370, 512
        $region36: #{tpu_custom_call.1} parent=31 // pred_fallthru
          _
        %s378 = sand.u32 %s34, 1
        %s379 = scalar_lea.sflag [#allocation6], %s378
        %s380 = sand.u32 %s84, 1
        %s381 = smul.addr %s380, 256
        %s382 = scalar_lea.vmem [#allocation5], %s381
        // Predicated region
        $region37: #{tpu_custom_call.1} parent=31 // pred_check
          %p383 = pneg %p97
        $region38: #{tpu_custom_call.1} parent=31 // pred_check_branch
          %385 = sbr.rel (%p383) target = $region40
        $region39: #{tpu_custom_call.1} parent=31 // pred_region
          %386 = dma.done %s379, 4096
        $region40: #{tpu_custom_call.1} parent=31 // pred_fallthru
          _
        %s387 = sand.u32 %s34, 1
        %s388 = scalar_lea.sflag [#allocation6], %s387
        %s389 = sand.u32 %s112, 1
        %s390 = smul.addr %s389, 8
        %s391 = scalar_lea.vmem [#allocation7], %s390
        // Predicated region
        $region41: #{tpu_custom_call.1} parent=31 // pred_check
          %p392 = pneg %p125
        $region42: #{tpu_custom_call.1} parent=31 // pred_check_branch
          %394 = sbr.rel (%p392) target = $region44
        $region43: #{tpu_custom_call.1} parent=31 // pred_region
          %395 = dma.done %s388, 128
        $region44: #{tpu_custom_call.1} parent=31 // pred_fallthru
          _
        %s396 = sand.u32 %s56, 1
        %s397 = scalar_lea.sflag [#allocation3], %s396
        %s398 = sand.u32 %s56, 1
        %s399 = smul.addr %s398, 32
        %s400 = scalar_lea.vmem [#allocation2], %s399
        %p401 = pneg %p69
        %p402 = pneg %p66
        %s403 = sand.u32 %s34, 1
        %s404 = scalar_lea.sflag [#allocation6], %s403
        %s405 = sand.u32 %s84, 1
        %s406 = smul.addr %s405, 256
        %s407 = scalar_lea.vmem [#allocation5], %s406
        %p408 = pneg %p97
        %p409 = pneg %p94
        %s410 = sand.u32 %s34, 1
        %s411 = scalar_lea.sflag [#allocation6], %s410
        %s412 = sand.u32 %s112, 1
        %s413 = smul.addr %s412, 8
        %s414 = scalar_lea.vmem [#allocation7], %s413
        %p415 = pneg %p125
        %p416 = pneg %p122
        %p417 = pneg %p151
        %p418 = pneg %p148
        %s419 = sand.u32 %s138, 1
        %s420 = scalar_lea.sflag [#allocation4], %s419
        %s421 = sand.u32 %s138, 1
        %s422 = smul.addr %s421, 8
        %s423 = scalar_lea.vmem [#allocation8], %s422
        %p424 = pneg %p177
        %p425 = pneg %p174
        %s426 = sand.u32 %s34, 1
        %s427 = scalar_lea.sflag [#allocation10], %s426
        %s428 = sand.u32 %s164, 1
        %s429 = smul.addr %s428, 32
        %s430 = scalar_lea.vmem [#allocation9], %s429
        %p431 = pneg %p203
        %p432 = pneg %p200
        %s433 = sand.u32 %s34, 1
        %s434 = scalar_lea.sflag [#allocation10], %s433
        %s435 = sand.u32 %s190, 1
        %s436 = smul.addr %s435, 32
        %s437 = scalar_lea.vmem [#allocation11], %s436
        %p438 = pneg %p229
        %p439 = pneg %p226
        %s440 = sand.u32 %s34, 1
        %s441 = scalar_lea.sflag [#allocation13], %s440
        %s442 = sand.u32 %s216, 1
        %s443 = smul.addr %s442, 32
        %s444 = scalar_lea.vmem [#allocation12], %s443
        %p445 = pneg %p255
        %p446 = pneg %p252
        %s447 = sand.u32 %s34, 1
        %s448 = scalar_lea.sflag [#allocation13], %s447
        %s449 = sand.u32 %s242, 1
        %s450 = smul.addr %s449, 64
        %s451 = scalar_lea.vmem [#allocation14], %s450
        %p452 = scmp.eq.s32.totalorder %s39, 0
        // Predicated region
        $region45: #{tpu_custom_call.1} parent=31 // pred_check
          %p453 = pneg %p452
        $region46: #{tpu_custom_call.1} parent=31 // pred_check_branch
          %455 = sbr.rel (%p453) target = $region48
        $region47: #{tpu_custom_call.1} parent=31 // pred_region
          %456 = vst [vmem:[%s423] sm:$0xff] 0.0
          %457 = vst [vmem:[%s430] sm:$0xff] 0.0
          %458 = vst [vmem:[%s430 + $0x8] sm:$0xff] 0.0
          %459 = vst [vmem:[%s430 + $0x10] sm:$0xff] 0.0
          %460 = vst [vmem:[%s430 + $0x18] sm:$0xff] 0.0
          %461 = vst [vmem:[%s437] sm:$0xff] 0.0
          %462 = vst [vmem:[%s437 + $0x8] sm:$0xff] 0.0
          %463 = vst [vmem:[%s437 + $0x10] sm:$0xff] 0.0
          %464 = vst [vmem:[%s437 + $0x18] sm:$0xff] 0.0
          %465 = vst [vmem:[%s444] sm:$0xff] 0.0
          %466 = vst [vmem:[%s444 + $0x8] sm:$0xff] 0.0
          %467 = vst [vmem:[%s444 + $0x10] sm:$0xff] 0.0
          %468 = vst [vmem:[%s444 + $0x18] sm:$0xff] 0.0
          %469 = vst [vmem:[%s451] sm:$0xff] 0.0
          %470 = vst [vmem:[%s451 + $0x8] sm:$0xff] 0.0
          %471 = vst [vmem:[%s451 + $0x10] sm:$0xff] 0.0
          %472 = vst [vmem:[%s451 + $0x18] sm:$0xff] 0.0
          %473 = vst [vmem:[%s451 + $0x20] sm:$0xff] 0.0
          %474 = vst [vmem:[%s451 + $0x28] sm:$0xff] 0.0
          %475 = vst [vmem:[%s451 + $0x30] sm:$0xff] 0.0
          %476 = vst [vmem:[%s451 + $0x38] sm:$0xff] 0.0
        $region48: #{tpu_custom_call.1} parent=31 // pred_fallthru
          _
        %v477 = vld [vmem:[%s391] sm:$0xff]
        %vm478 = vcmp.ge.s32.totalorder %v477, 0
        %v479 = vsel %vm478, 1, 0
        %v480 = vcvt.s32.f32 %v479
        %vm481 = vcmp.eq.s32.totalorder %v477, 0
        %vm482 = vcmp.eq.s32.totalorder %v477, 1
        %vm483 = vcmp.eq.s32.totalorder %v477, 2
        %vm484 = vcmp.eq.s32.totalorder %v477, 3
        %v485 = vsel %vm481, 1, 0
        %v486 = vsel %vm482, 1, 0
        %v487 = vsel %vm483, 1, 0
        %v488 = vsel %vm484, 1, 0
        %v489 = vcvt.s32.f32 %v485
        %v490 = vcvt.s32.f32 %v486
        %v491 = vcvt.s32.f32 %v487
        %v492 = vcvt.s32.f32 %v488
        %v493 = vld [vmem:[%s373] sm:$0xff]
        %v494 = vld [vmem:[%s373 + $0x8] sm:$0xff]
        %v495 = vld [vmem:[%s373 + $0x10] sm:$0xff]
        %v496 = vld [vmem:[%s373 + $0x18] sm:$0xff]
        %v497 = vmax.f32 %v493, %v494
        %v498 = vmax.f32 %v495, %v496
        %v499 = vmax.f32 %v497, %v498
        %v500 = vsub.f32 %v493, %v499
        %v501 = vsub.f32 %v494, %v499
        %v502 = vsub.f32 %v495, %v499
        %v503 = vsub.f32 %v496, %v499
        %v504 = vmul.f32 %v500, 1.442695
        %v505 = vpow.pop %v504
        %v506 = vmul.f32 %v501, 1.442695
        %v507 = vpow.pop %v506
        %v508 = vmul.f32 %v502, 1.442695
        %v509 = vpow.pop %v508
        %v510 = vmul.f32 %v503, 1.442695
        %v511 = vpow.pop %v510
        %v512 = vadd.f32 %v505, %v507
        %v513 = vadd.f32 %v512, %v509
        %v514 = vadd.f32 %v513, %v511
        %v515 = vlog2.pop %v514
        %v516 = vmul.f32 %v515, 0.6931472
        %v517 = vadd.f32 %v499, %v516
        %v518 = vmul.f32 %v493, %v489
        %v519 = vmul.f32 %v494, %v490
        %v520 = vmul.f32 %v495, %v491
        %v521 = vmul.f32 %v496, %v492
        %v522 = vadd.f32 %v518, %v519
        %v523 = vadd.f32 %v522, %v520
        %v524 = vadd.f32 %v523, %v521
        %v525 = vsub.f32 %v517, %v524
        %v526 = vmul.f32 %v525, %v480
        %v527 = vrcp.pop %v514
        %v528 = vmul.f32 %v480, %v527
        %v529 = vmul.f32 %v505, %v528
        %v530 = vmul.f32 %v507, %v528
        %v531 = vmul.f32 %v509, %v528
        %v532 = vmul.f32 %v511, %v528
        %v533 = vld [vmem:[%s423] sm:$0xff]
        %v534 = vadd.f32 %v526, 0.0
        %v535 = vadd.f32 %v533, %v534
        %536 = vst [vmem:[%s423] sm:$0xff] %v535
        %v537 = vld [vmem:[%s430] sm:$0xff]
        %v538 = vld [vmem:[%s430 + $0x8] sm:$0xff]
        %v539 = vld [vmem:[%s430 + $0x10] sm:$0xff]
        %v540 = vld [vmem:[%s430 + $0x18] sm:$0xff]
        %v541 = vmul.f32 %v529, %v489
        %v542 = vmul.f32 %v530, %v490
        %v543 = vmul.f32 %v531, %v491
        %v544 = vmul.f32 %v532, %v492
        %v545 = vadd.f32 %v541, 0.0
        %v546 = vadd.f32 %v542, 0.0
        %v547 = vadd.f32 %v543, 0.0
        %v548 = vadd.f32 %v544, 0.0
        %v549 = vadd.f32 %v537, %v545
        %v550 = vadd.f32 %v538, %v546
        %v551 = vadd.f32 %v539, %v547
        %v552 = vadd.f32 %v540, %v548
        %553 = vst [vmem:[%s430] sm:$0xff] %v549
        %554 = vst [vmem:[%s430 + $0x8] sm:$0xff] %v550
        %555 = vst [vmem:[%s430 + $0x10] sm:$0xff] %v551
        %556 = vst [vmem:[%s430 + $0x18] sm:$0xff] %v552
        %v557 = vld [vmem:[%s437] sm:$0xff]
        %v558 = vld [vmem:[%s437 + $0x8] sm:$0xff]
        %v559 = vld [vmem:[%s437 + $0x10] sm:$0xff]
        %v560 = vld [vmem:[%s437 + $0x18] sm:$0xff]
        %v561 = vadd.f32 %v529, 0.0
        %v562 = vadd.f32 %v530, 0.0
        %v563 = vadd.f32 %v531, 0.0
        %v564 = vadd.f32 %v532, 0.0
        %v565 = vadd.f32 %v557, %v561
        %v566 = vadd.f32 %v558, %v562
        %v567 = vadd.f32 %v559, %v563
        %v568 = vadd.f32 %v560, %v564
        %569 = vst [vmem:[%s437] sm:$0xff] %v565
        %570 = vst [vmem:[%s437 + $0x8] sm:$0xff] %v566
        %571 = vst [vmem:[%s437 + $0x10] sm:$0xff] %v567
        %572 = vst [vmem:[%s437 + $0x18] sm:$0xff] %v568
        %v573 = vld [vmem:[%s444] sm:$0xff]
        %v574 = vld [vmem:[%s444 + $0x8] sm:$0xff]
        %v575 = vld [vmem:[%s444 + $0x10] sm:$0xff]
        %v576 = vld [vmem:[%s444 + $0x18] sm:$0xff]
        %v577 = vadd.f32 %v489, 0.0
        %v578 = vadd.f32 %v490, 0.0
        %v579 = vadd.f32 %v491, 0.0
        %v580 = vadd.f32 %v492, 0.0
        %v581 = vadd.f32 %v573, %v577
        %v582 = vadd.f32 %v574, %v578
        %v583 = vadd.f32 %v575, %v579
        %v584 = vadd.f32 %v576, %v580
        %585 = vst [vmem:[%s444] sm:$0xff] %v581
        %586 = vst [vmem:[%s444 + $0x8] sm:$0xff] %v582
        %587 = vst [vmem:[%s444 + $0x10] sm:$0xff] %v583
        %588 = vst [vmem:[%s444 + $0x18] sm:$0xff] %v584
        %v589 = vld [vmem:[%s382] sm:$0xff]
        %v590 = vld [vmem:[%s382 + $0x8] sm:$0xff]
        %v591 = vld [vmem:[%s382 + $0x10] sm:$0xff]
        %v592 = vld [vmem:[%s382 + $0x18] sm:$0xff]
        %v593 = vmax.f32 %v589, %v590
        %v594 = vmax.f32 %v591, %v592
        %v595 = vmax.f32 %v593, %v594
        %v596 = vsub.f32 %v589, %v595
        %v597 = vsub.f32 %v590, %v595
        %v598 = vsub.f32 %v591, %v595
        %v599 = vsub.f32 %v592, %v595
        %v600 = vmul.f32 %v596, 1.442695
        %v601 = vpow.pop %v600
        %v602 = vmul.f32 %v597, 1.442695
        %v603 = vpow.pop %v602
        %v604 = vmul.f32 %v598, 1.442695
        %v605 = vpow.pop %v604
        %v606 = vmul.f32 %v599, 1.442695
        %v607 = vpow.pop %v606
        %v608 = vadd.f32 %v601, %v603
        %v609 = vadd.f32 %v608, %v605
        %v610 = vadd.f32 %v609, %v607
        %v611 = vlog2.pop %v610
        %v612 = vmul.f32 %v611, 0.6931472
        %v613 = vadd.f32 %v595, %v612
        %v614 = vmul.f32 %v589, %v489
        %v615 = vmul.f32 %v590, %v490
        %v616 = vmul.f32 %v591, %v491
        %v617 = vmul.f32 %v592, %v492
        %v618 = vadd.f32 %v614, %v615
        %v619 = vadd.f32 %v618, %v616
        %v620 = vadd.f32 %v619, %v617
        %v621 = vld [vmem:[%s451] sm:$0xff]
        %v622 = vsub.f32 %v620, %v613
        %v623 = vmul.f32 %v622, %v480
        %v624 = vadd.f32 %v623, 0.0
        %v625 = vadd.f32 %v621, %v624
        %626 = vst [vmem:[%s451] sm:$0xff] %v625
        %s627 = scalar_lea.vmem %s382, 32 [#allocation5]
        %v628 = vld [vmem:[%s627] sm:$0xff]
        %v629 = vld [vmem:[%s627 + $0x8] sm:$0xff]
        %v630 = vld [vmem:[%s627 + $0x10] sm:$0xff]
        %v631 = vld [vmem:[%s627 + $0x18] sm:$0xff]
        %v632 = vmax.f32 %v628, %v629
        %v633 = vmax.f32 %v630, %v631
        %v634 = vmax.f32 %v632, %v633
        %v635 = vsub.f32 %v628, %v634
        %v636 = vsub.f32 %v629, %v634
        %v637 = vsub.f32 %v630, %v634
        %v638 = vsub.f32 %v631, %v634
        %v639 = vmul.f32 %v635, 1.442695
        %v640 = vpow.pop %v639
        %v641 = vmul.f32 %v636, 1.442695
        %v642 = vpow.pop %v641
        %v643 = vmul.f32 %v637, 1.442695
        %v644 = vpow.pop %v643
        %v645 = vmul.f32 %v638, 1.442695
        %v646 = vpow.pop %v645
        %v647 = vadd.f32 %v640, %v642
        %v648 = vadd.f32 %v647, %v644
        %v649 = vadd.f32 %v648, %v646
        %v650 = vlog2.pop %v649
        %v651 = vmul.f32 %v650, 0.6931472
        %v652 = vadd.f32 %v634, %v651
        %v653 = vmul.f32 %v628, %v489
        %v654 = vmul.f32 %v629, %v490
        %v655 = vmul.f32 %v630, %v491
        %v656 = vmul.f32 %v631, %v492
        %v657 = vadd.f32 %v653, %v654
        %v658 = vadd.f32 %v657, %v655
        %v659 = vadd.f32 %v658, %v656
        %s660 = scalar_lea.vmem %s451, 8 [#allocation14]
        %v661 = vld [vmem:[%s660] sm:$0xff]
        %v662 = vsub.f32 %v659, %v652
        %v663 = vmul.f32 %v662, %v480
        %v664 = vadd.f32 %v663, 0.0
        %v665 = vadd.f32 %v661, %v664
        %666 = vst [vmem:[%s660] sm:$0xff] %v665
        %s667 = scalar_lea.vmem %s382, 64 [#allocation5]
        %v668 = vld [vmem:[%s667] sm:$0xff]
        %v669 = vld [vmem:[%s667 + $0x8] sm:$0xff]
        %v670 = vld [vmem:[%s667 + $0x10] sm:$0xff]
        %v671 = vld [vmem:[%s667 + $0x18] sm:$0xff]
        %v672 = vmax.f32 %v668, %v669
        %v673 = vmax.f32 %v670, %v671
        %v674 = vmax.f32 %v672, %v673
        %v675 = vsub.f32 %v668, %v674
        %v676 = vsub.f32 %v669, %v674
        %v677 = vsub.f32 %v670, %v674
        %v678 = vsub.f32 %v671, %v674
        %v679 = vmul.f32 %v675, 1.442695
        %v680 = vpow.pop %v679
        %v681 = vmul.f32 %v676, 1.442695
        %v682 = vpow.pop %v681
        %v683 = vmul.f32 %v677, 1.442695
        %v684 = vpow.pop %v683
        %v685 = vmul.f32 %v678, 1.442695
        %v686 = vpow.pop %v685
        %v687 = vadd.f32 %v680, %v682
        %v688 = vadd.f32 %v687, %v684
        %v689 = vadd.f32 %v688, %v686
        %v690 = vlog2.pop %v689
        %v691 = vmul.f32 %v690, 0.6931472
        %v692 = vadd.f32 %v674, %v691
        %v693 = vmul.f32 %v668, %v489
        %v694 = vmul.f32 %v669, %v490
        %v695 = vmul.f32 %v670, %v491
        %v696 = vmul.f32 %v671, %v492
        %v697 = vadd.f32 %v693, %v694
        %v698 = vadd.f32 %v697, %v695
        %v699 = vadd.f32 %v698, %v696
        %s700 = scalar_lea.vmem %s451, 16 [#allocation14]
        %v701 = vld [vmem:[%s700] sm:$0xff]
        %v702 = vsub.f32 %v699, %v692
        %v703 = vmul.f32 %v702, %v480
        %v704 = vadd.f32 %v703, 0.0
        %v705 = vadd.f32 %v701, %v704
        %706 = vst [vmem:[%s700] sm:$0xff] %v705
        %s707 = scalar_lea.vmem %s382, 96 [#allocation5]
        %v708 = vld [vmem:[%s707] sm:$0xff]
        %v709 = vld [vmem:[%s707 + $0x8] sm:$0xff]
        %v710 = vld [vmem:[%s707 + $0x10] sm:$0xff]
        %v711 = vld [vmem:[%s707 + $0x18] sm:$0xff]
        %v712 = vmax.f32 %v708, %v709
        %v713 = vmax.f32 %v710, %v711
        %v714 = vmax.f32 %v712, %v713
        %v715 = vsub.f32 %v708, %v714
        %v716 = vsub.f32 %v709, %v714
        %v717 = vsub.f32 %v710, %v714
        %v718 = vsub.f32 %v711, %v714
        %v719 = vmul.f32 %v715, 1.442695
        %v720 = vpow.pop %v719
        %v721 = vmul.f32 %v716, 1.442695
        %v722 = vpow.pop %v721
        %v723 = vmul.f32 %v717, 1.442695
        %v724 = vpow.pop %v723
        %v725 = vmul.f32 %v718, 1.442695
        %v726 = vpow.pop %v725
        %v727 = vadd.f32 %v720, %v722
        %v728 = vadd.f32 %v727, %v724
        %v729 = vadd.f32 %v728, %v726
        %v730 = vlog2.pop %v729
        %v731 = vmul.f32 %v730, 0.6931472
        %v732 = vadd.f32 %v714, %v731
        %v733 = vmul.f32 %v708, %v489
        %v734 = vmul.f32 %v709, %v490
        %v735 = vmul.f32 %v710, %v491
        %v736 = vmul.f32 %v711, %v492
        %v737 = vadd.f32 %v733, %v734
        %v738 = vadd.f32 %v737, %v735
        %v739 = vadd.f32 %v738, %v736
        %s740 = scalar_lea.vmem %s451, 24 [#allocation14]
        %v741 = vld [vmem:[%s740] sm:$0xff]
        %v742 = vsub.f32 %v739, %v732
        %v743 = vmul.f32 %v742, %v480
        %v744 = vadd.f32 %v743, 0.0
        %v745 = vadd.f32 %v741, %v744
        %746 = vst [vmem:[%s740] sm:$0xff] %v745
        %s747 = scalar_lea.vmem %s382, 128 [#allocation5]
        %v748 = vld [vmem:[%s747] sm:$0xff]
        %v749 = vld [vmem:[%s747 + $0x8] sm:$0xff]
        %v750 = vld [vmem:[%s747 + $0x10] sm:$0xff]
        %v751 = vld [vmem:[%s747 + $0x18] sm:$0xff]
        %v752 = vmax.f32 %v748, %v749
        %v753 = vmax.f32 %v750, %v751
        %v754 = vmax.f32 %v752, %v753
        %v755 = vsub.f32 %v748, %v754
        %v756 = vsub.f32 %v749, %v754
        %v757 = vsub.f32 %v750, %v754
        %v758 = vsub.f32 %v751, %v754
        %v759 = vmul.f32 %v755, 1.442695
        %v760 = vpow.pop %v759
        %v761 = vmul.f32 %v756, 1.442695
        %v762 = vpow.pop %v761
        %v763 = vmul.f32 %v757, 1.442695
        %v764 = vpow.pop %v763
        %v765 = vmul.f32 %v758, 1.442695
        %v766 = vpow.pop %v765
        %v767 = vadd.f32 %v760, %v762
        %v768 = vadd.f32 %v767, %v764
        %v769 = vadd.f32 %v768, %v766
        %v770 = vlog2.pop %v769
        %v771 = vmul.f32 %v770, 0.6931472
        %v772 = vadd.f32 %v754, %v771
        %v773 = vmul.f32 %v748, %v489
        %v774 = vmul.f32 %v749, %v490
        %v775 = vmul.f32 %v750, %v491
        %v776 = vmul.f32 %v751, %v492
        %v777 = vadd.f32 %v773, %v774
        %v778 = vadd.f32 %v777, %v775
        %v779 = vadd.f32 %v778, %v776
        %s780 = scalar_lea.vmem %s451, 32 [#allocation14]
        %v781 = vld [vmem:[%s780] sm:$0xff]
        %v782 = vsub.f32 %v779, %v772
        %v783 = vmul.f32 %v782, %v480
        %v784 = vadd.f32 %v783, 0.0
        %v785 = vadd.f32 %v781, %v784
        %786 = vst [vmem:[%s780] sm:$0xff] %v785
        %s787 = scalar_lea.vmem %s382, 160 [#allocation5]
        %v788 = vld [vmem:[%s787] sm:$0xff]
        %v789 = vld [vmem:[%s787 + $0x8] sm:$0xff]
        %v790 = vld [vmem:[%s787 + $0x10] sm:$0xff]
        %v791 = vld [vmem:[%s787 + $0x18] sm:$0xff]
        %v792 = vmax.f32 %v788, %v789
        %v793 = vmax.f32 %v790, %v791
        %v794 = vmax.f32 %v792, %v793
        %v795 = vsub.f32 %v788, %v794
        %v796 = vsub.f32 %v789, %v794
        %v797 = vsub.f32 %v790, %v794
        %v798 = vsub.f32 %v791, %v794
        %v799 = vmul.f32 %v795, 1.442695
        %v800 = vpow.pop %v799
        %v801 = vmul.f32 %v796, 1.442695
        %v802 = vpow.pop %v801
        %v803 = vmul.f32 %v797, 1.442695
        %v804 = vpow.pop %v803
        %v805 = vmul.f32 %v798, 1.442695
        %v806 = vpow.pop %v805
        %v807 = vadd.f32 %v800, %v802
        %v808 = vadd.f32 %v807, %v804
        %v809 = vadd.f32 %v808, %v806
        %v810 = vlog2.pop %v809
        %v811 = vmul.f32 %v810, 0.6931472
        %v812 = vadd.f32 %v794, %v811
        %v813 = vmul.f32 %v788, %v489
        %v814 = vmul.f32 %v789, %v490
        %v815 = vmul.f32 %v790, %v491
        %v816 = vmul.f32 %v791, %v492
        %v817 = vadd.f32 %v813, %v814
        %v818 = vadd.f32 %v817, %v815
        %v819 = vadd.f32 %v818, %v816
        %s820 = scalar_lea.vmem %s451, 40 [#allocation14]
        %v821 = vld [vmem:[%s820] sm:$0xff]
        %v822 = vsub.f32 %v819, %v812
        %v823 = vmul.f32 %v822, %v480
        %v824 = vadd.f32 %v823, 0.0
        %v825 = vadd.f32 %v821, %v824
        %826 = vst [vmem:[%s820] sm:$0xff] %v825
        %s827 = scalar_lea.vmem %s382, 192 [#allocation5]
        %v828 = vld [vmem:[%s827] sm:$0xff]
        %v829 = vld [vmem:[%s827 + $0x8] sm:$0xff]
        %v830 = vld [vmem:[%s827 + $0x10] sm:$0xff]
        %v831 = vld [vmem:[%s827 + $0x18] sm:$0xff]
        %v832 = vmax.f32 %v828, %v829
        %v833 = vmax.f32 %v830, %v831
        %v834 = vmax.f32 %v832, %v833
        %v835 = vsub.f32 %v828, %v834
        %v836 = vsub.f32 %v829, %v834
        %v837 = vsub.f32 %v830, %v834
        %v838 = vsub.f32 %v831, %v834
        %v839 = vmul.f32 %v835, 1.442695
        %v840 = vpow.pop %v839
        %v841 = vmul.f32 %v836, 1.442695
        %v842 = vpow.pop %v841
        %v843 = vmul.f32 %v837, 1.442695
        %v844 = vpow.pop %v843
        %v845 = vmul.f32 %v838, 1.442695
        %v846 = vpow.pop %v845
        %v847 = vadd.f32 %v840, %v842
        %v848 = vadd.f32 %v847, %v844
        %v849 = vadd.f32 %v848, %v846
        %v850 = vlog2.pop %v849
        %v851 = vmul.f32 %v850, 0.6931472
        %v852 = vadd.f32 %v834, %v851
        %v853 = vmul.f32 %v828, %v489
        %v854 = vmul.f32 %v829, %v490
        %v855 = vmul.f32 %v830, %v491
        %v856 = vmul.f32 %v831, %v492
        %v857 = vadd.f32 %v853, %v854
        %v858 = vadd.f32 %v857, %v855
        %v859 = vadd.f32 %v858, %v856
        %s860 = scalar_lea.vmem %s451, 48 [#allocation14]
        %v861 = vld [vmem:[%s860] sm:$0xff]
        %v862 = vsub.f32 %v859, %v852
        %v863 = vmul.f32 %v862, %v480
        %v864 = vadd.f32 %v863, 0.0
        %v865 = vadd.f32 %v861, %v864
        %866 = vst [vmem:[%s860] sm:$0xff] %v865
        %s867 = scalar_lea.vmem %s382, 224 [#allocation5]
        %v868 = vld [vmem:[%s867] sm:$0xff]
        %v869 = vld [vmem:[%s867 + $0x8] sm:$0xff]
        %v870 = vld [vmem:[%s867 + $0x10] sm:$0xff]
        %v871 = vld [vmem:[%s867 + $0x18] sm:$0xff]
        %v872 = vmax.f32 %v868, %v869
        %v873 = vmax.f32 %v870, %v871
        %v874 = vmax.f32 %v872, %v873
        %v875 = vsub.f32 %v868, %v874
        %v876 = vsub.f32 %v869, %v874
        %v877 = vsub.f32 %v870, %v874
        %v878 = vsub.f32 %v871, %v874
        %v879 = vmul.f32 %v875, 1.442695
        %v880 = vpow.pop %v879
        %v881 = vmul.f32 %v876, 1.442695
        %v882 = vpow.pop %v881
        %v883 = vmul.f32 %v877, 1.442695
        %v884 = vpow.pop %v883
        %v885 = vmul.f32 %v878, 1.442695
        %v886 = vpow.pop %v885
        %v887 = vadd.f32 %v880, %v882
        %v888 = vadd.f32 %v887, %v884
        %v889 = vadd.f32 %v888, %v886
        %v890 = vlog2.pop %v889
        %v891 = vmul.f32 %v890, 0.6931472
        %v892 = vadd.f32 %v874, %v891
        %v893 = vmul.f32 %v868, %v489
        %v894 = vmul.f32 %v869, %v490
        %v895 = vmul.f32 %v870, %v491
        %v896 = vmul.f32 %v871, %v492
        %v897 = vadd.f32 %v893, %v894
        %v898 = vadd.f32 %v897, %v895
        %v899 = vadd.f32 %v898, %v896
        %s900 = scalar_lea.vmem %s451, 56 [#allocation14]
        %v901 = vld [vmem:[%s900] sm:$0xff]
        %v902 = vsub.f32 %v899, %v892
        %v903 = vmul.f32 %v902, %v480
        %v904 = vadd.f32 %v903, 0.0
        %v905 = vadd.f32 %v901, %v904
        %906 = vst [vmem:[%s900] sm:$0xff] %v905
        %s907 = sand.u32 %s138, 1
        %s908 = scalar_lea.sflag [#allocation4], %s907
        %s909 = sand.u32 %s138, 1
        %s910 = smul.addr %s909, 8
        %s911 = scalar_lea.vmem [#allocation8], %s910
        %s912 = sand.u32 %s34, 1
        %s913 = scalar_lea.sflag [#allocation10], %s912
        %s914 = sand.u32 %s164, 1
        %s915 = smul.addr %s914, 32
        %s916 = scalar_lea.vmem [#allocation9], %s915
        %s917 = sand.u32 %s34, 1
        %s918 = scalar_lea.sflag [#allocation10], %s917
        %s919 = sand.u32 %s190, 1
        %s920 = smul.addr %s919, 32
        %s921 = scalar_lea.vmem [#allocation11], %s920
        %s922 = sand.u32 %s34, 1
        %s923 = scalar_lea.sflag [#allocation13], %s922
        %s924 = sand.u32 %s216, 1
        %s925 = smul.addr %s924, 32
        %s926 = scalar_lea.vmem [#allocation12], %s925
        %s927 = sand.u32 %s34, 1
        %s928 = scalar_lea.sflag [#allocation13], %s927
        %s929 = sand.u32 %s242, 1
        %s930 = smul.addr %s929, 64
        %s931 = scalar_lea.vmem [#allocation14], %s930
        // Predicated region
        $region49: #{tpu_custom_call.1} parent=31 // pred_check
          %p932 = pneg %p148
        $region50: #{tpu_custom_call.1} parent=31 // pred_check_branch
          %934 = sbr.rel (%p932) target = $region52
        $region51: #{tpu_custom_call.1} parent=31 // pred_region
          %s936 = ssub.s32 128, 128
          %937 = vsyncadd %s908, %s936
          %s938 = smul.addr %s38, 128
          %s939 = scalar_lea.hbm %s3, %s938
          %s941 = sshll.u32 %s911, 4
          %s942 = int_to_ptr.vmem [resolvable:$true] %s941
          %944 = dma.vmem_to_hbm [thread:$0]  %s942, 128, %s939, %s908
        $region52: #{tpu_custom_call.1} parent=31 // pred_fallthru
          _
        // Predicated region
        $region53: #{tpu_custom_call.1} parent=31 // pred_check
          %p945 = pneg %p174
        $region54: #{tpu_custom_call.1} parent=31 // pred_check_branch
          %947 = sbr.rel (%p945) target = $region56
        $region55: #{tpu_custom_call.1} parent=31 // pred_region
          %s949 = ssub.s32 512, 512
          %950 = vsyncadd %s913, %s949
          %s951 = smul.addr %s38, 4
          %s952 = smul.addr %s951, 128
          %s953 = scalar_lea.hbm %s4, %s952
          %s954 = sshll.u32 %s916, 4
          %s955 = int_to_ptr.vmem [resolvable:$true] %s954
          %960 = dma.vmem_to_hbm [thread:$0]  %s955, 512, %s953, %s913, 128, 128, 8
        $region56: #{tpu_custom_call.1} parent=31 // pred_fallthru
          _
        // Predicated region
        $region57: #{tpu_custom_call.1} parent=31 // pred_check
          %p961 = pneg %p200
        $region58: #{tpu_custom_call.1} parent=31 // pred_check_branch
          %963 = sbr.rel (%p961) target = $region60
        $region59: #{tpu_custom_call.1} parent=31 // pred_region
          %s965 = ssub.s32 512, 512
          %966 = vsyncadd %s918, %s965
          %s967 = smul.addr %s38, 4
          %s968 = smul.addr %s967, 128
          %s969 = scalar_lea.hbm %s5, %s968
          %s970 = sshll.u32 %s921, 4
          %s971 = int_to_ptr.vmem [resolvable:$true] %s970
          %976 = dma.vmem_to_hbm [thread:$0]  %s971, 512, %s969, %s918, 128, 128, 8
        $region60: #{tpu_custom_call.1} parent=31 // pred_fallthru
          _
        // Predicated region
        $region61: #{tpu_custom_call.1} parent=31 // pred_check
          %p977 = pneg %p226
        $region62: #{tpu_custom_call.1} parent=31 // pred_check_branch
          %979 = sbr.rel (%p977) target = $region64
        $region63: #{tpu_custom_call.1} parent=31 // pred_region
          %s981 = ssub.s32 512, 512
          %982 = vsyncadd %s923, %s981
          %s983 = smul.addr %s38, 4
          %s984 = smul.addr %s983, 128
          %s985 = scalar_lea.hbm %s6, %s984
          %s986 = sshll.u32 %s926, 4
          %s987 = int_to_ptr.vmem [resolvable:$true] %s986
          %992 = dma.vmem_to_hbm [thread:$0]  %s987, 512, %s985, %s923, 128, 128, 8
        $region64: #{tpu_custom_call.1} parent=31 // pred_fallthru
          _
        // Predicated region
        $region65: #{tpu_custom_call.1} parent=31 // pred_check
          %p993 = pneg %p252
        $region66: #{tpu_custom_call.1} parent=31 // pred_check_branch
          %995 = sbr.rel (%p993) target = $region68
        $region67: #{tpu_custom_call.1} parent=31 // pred_region
          %s997 = ssub.s32 1024, 1024
          %998 = vsyncadd %s928, %s997
          %s999 = smul.addr %s38, 8
          %s1000 = smul.addr %s999, 128
          %s1001 = scalar_lea.hbm %s7, %s1000
          %s1002 = sshll.u32 %s931, 4
          %s1003 = int_to_ptr.vmem [resolvable:$true] %s1002
          %1008 = dma.vmem_to_hbm [thread:$0]  %s1003, 1024, %s1001, %s928, 128, 128, 8
        $region68: #{tpu_custom_call.1} parent=31 // pred_fallthru
          _
      $region32: #{tpu_custom_call.1} parent=5 // pred_fallthru
        _
      %p1009 = scmp.le.s32.totalorder 2, %s29
      // Predicated region
      $region69: #{tpu_custom_call.1} parent=5 // pred_check
        %p1010 = pneg %p1009
      $region70: #{tpu_custom_call.1} parent=5 // pred_check_branch
        %1012 = sbr.rel (%p1010) target = $region72
      $region71: #{tpu_custom_call.1} parent=5 // pred_region
        %s1013 = ssub.s32 %s29, 2
        // Predicated region
        $region73: #{tpu_custom_call.1} parent=71 // pred_check
          %p1014 = pneg %p154
        $region74: #{tpu_custom_call.1} parent=71 // pred_check_branch
          %1016 = sbr.rel (%p1014) target = $region76
        $region75: #{tpu_custom_call.1} parent=71 // pred_region
          %s1017 = sand.u32 %s139, 1
          %s1018 = scalar_lea.sflag [#allocation4], %s1017
          %s1019 = sand.u32 %s139, 1
          %s1020 = smul.addr %s1019, 8
          %s1021 = scalar_lea.vmem [#allocation8], %s1020
          %1022 = dma.done %s1018, 128
        $region76: #{tpu_custom_call.1} parent=71 // pred_fallthru
          _
        // Predicated region
        $region77: #{tpu_custom_call.1} parent=71 // pred_check
          %p1023 = pneg %p180
        $region78: #{tpu_custom_call.1} parent=71 // pred_check_branch
          %1025 = sbr.rel (%p1023) target = $region80
        $region79: #{tpu_custom_call.1} parent=71 // pred_region
          %s1026 = sand.u32 %s35, 1
          %s1027 = scalar_lea.sflag [#allocation10], %s1026
          %s1028 = sand.u32 %s165, 1
          %s1029 = smul.addr %s1028, 32
          %s1030 = scalar_lea.vmem [#allocation9], %s1029
          %1031 = dma.done %s1027, 512
        $region80: #{tpu_custom_call.1} parent=71 // pred_fallthru
          _
        // Predicated region
        $region81: #{tpu_custom_call.1} parent=71 // pred_check
          %p1032 = pneg %p206
        $region82: #{tpu_custom_call.1} parent=71 // pred_check_branch
          %1034 = sbr.rel (%p1032) target = $region84
        $region83: #{tpu_custom_call.1} parent=71 // pred_region
          %s1035 = sand.u32 %s35, 1
          %s1036 = scalar_lea.sflag [#allocation10], %s1035
          %s1037 = sand.u32 %s191, 1
          %s1038 = smul.addr %s1037, 32
          %s1039 = scalar_lea.vmem [#allocation11], %s1038
          %1040 = dma.done %s1036, 512
        $region84: #{tpu_custom_call.1} parent=71 // pred_fallthru
          _
        // Predicated region
        $region85: #{tpu_custom_call.1} parent=71 // pred_check
          %p1041 = pneg %p232
        $region86: #{tpu_custom_call.1} parent=71 // pred_check_branch
          %1043 = sbr.rel (%p1041) target = $region88
        $region87: #{tpu_custom_call.1} parent=71 // pred_region
          %s1044 = sand.u32 %s35, 1
          %s1045 = scalar_lea.sflag [#allocation13], %s1044
          %s1046 = sand.u32 %s217, 1
          %s1047 = smul.addr %s1046, 32
          %s1048 = scalar_lea.vmem [#allocation12], %s1047
          %1049 = dma.done %s1045, 512
        $region88: #{tpu_custom_call.1} parent=71 // pred_fallthru
          _
        // Predicated region
        $region89: #{tpu_custom_call.1} parent=71 // pred_check
          %p1050 = pneg %p258
        $region90: #{tpu_custom_call.1} parent=71 // pred_check_branch
          %1052 = sbr.rel (%p1050) target = $region92
        $region91: #{tpu_custom_call.1} parent=71 // pred_region
          %s1053 = sand.u32 %s35, 1
          %s1054 = scalar_lea.sflag [#allocation13], %s1053
          %s1055 = sand.u32 %s243, 1
          %s1056 = smul.addr %s1055, 64
          %s1057 = scalar_lea.vmem [#allocation14], %s1056
          %1058 = dma.done %s1054, 1024
        $region92: #{tpu_custom_call.1} parent=71 // pred_fallthru
          _
      $region72: #{tpu_custom_call.1} parent=5 // pred_fallthru
        _
    $region6: #{tpu_custom_call.1} parent=1 // loop_footer
      %s33 = sadd.s32 1, %s29
    $region7: #{tpu_custom_call.1} parent=1 // loop_footer_branch
      %28 = sbr.rel target = $region3
    $region8: #{tpu_custom_call.1} parent=1 // loop_exit
      _
    %1059 = vsyncpa [#allocation3], 1
    %s1060 = scalar_lea.sflag [#allocation3], 1
    %1061 = vsyncpa %s1060, 1
    %1062 = vsyncpa [#allocation6], 1
    %s1063 = scalar_lea.sflag [#allocation6], 1
    %1064 = vsyncpa %s1063, 1
    %1065 = vsyncpa [#allocation4], 1
    %s1066 = scalar_lea.sflag [#allocation4], 1
    %1067 = vsyncpa %s1066, 1
    %1068 = vsyncpa [#allocation10], 1
    %s1069 = scalar_lea.sflag [#allocation10], 1
    %1070 = vsyncpa %s1069, 1
    %1071 = vsyncpa [#allocation13], 1
    %s1072 = scalar_lea.sflag [#allocation13], 1
    %1073 = vsyncpa %s1072, 1

</llo_original>
